<compile_context>
chip_gen: v6e
topology: v6e:2x2x1
jax: 0.10.0
libtpu: 0.0.40
codegen_flags: <defaults>
</compile_context>

<pallas_src>
import math

import jax
import jax.numpy as jnp
from jax.experimental import pallas as pl
from jax.experimental.pallas import tpu as pltpu


def _round_up(n: int, m: int) -> int:
    return ((n + m - 1) // m) * m


# --------------------------------------------------------------------------
# Kernel: three matmuls + bias + ReLU on one batch tile.
#   x     : (tb, S)  fp32   (S = 37, unpadded)
#   w1/b1 : (S, H1) fp32 / (1, H1) fp32
#   w2/b2 : (H1, H2) bf16 / (1, H2) fp32
#   w3/b3 : (H2, A) bf16 / (1, A) fp32
#   out   : (tb, A) fp32   (A = 4, unpadded -> tiny writeback)
# --------------------------------------------------------------------------
def qnetwork_kernel(x_ref, w1_ref, b1_ref, w2_ref, b2_ref, w3_ref, b3_ref, o_ref):
    # Layer 1 in fp32: keeps the raw state precision; MXU fp32 rate is
    # irrelevant here (kernel is HBM/overhead bound, FLOPs are tiny).
    x = x_ref[...]
    h1 = jnp.dot(x, w1_ref[...], preferred_element_type=jnp.float32) + b1_ref[...]
    # Cast then ReLU (identical result, bf16 elementwise is cheaper on v6e/v7x).
    h1 = jnp.maximum(h1.astype(jnp.bfloat16), 0)

    h2 = jnp.dot(h1, w2_ref[...], preferred_element_type=jnp.float32) + b2_ref[...]
    h2 = jnp.maximum(h2.astype(jnp.bfloat16), 0)

    o_ref[...] = (
        jnp.dot(h2, w3_ref[...], preferred_element_type=jnp.float32) + b3_ref[...]
    ).astype(o_ref.dtype)


# --------------------------------------------------------------------------
# Parameter helpers
# --------------------------------------------------------------------------
def init_qnetwork_params(key, state_size, action_size, fc1_units=64, fc2_units=64):
    """PyTorch nn.Linear-style init: U(-1/sqrt(fan_in), 1/sqrt(fan_in)).
    Weights stored [in_features, out_features] so the kernel does x @ W + b."""

    def linear(k, fan_in, fan_out):
        kw, kb = jax.random.split(k)
        bound = 1.0 / math.sqrt(fan_in)
        w = jax.random.uniform(kw, (fan_in, fan_out), jnp.float32, -bound, bound)
        b = jax.random.uniform(kb, (1, fan_out), jnp.float32, -bound, bound)
        return w, b

    k1, k2, k3 = jax.random.split(key, 3)
    w1, b1 = linear(k1, state_size, fc1_units)
    w2, b2 = linear(k2, fc1_units, fc2_units)
    w3, b3 = linear(k3, fc2_units, action_size)
    return {"w1": w1, "b1": b1, "w2": w2, "b2": b2, "w3": w3, "b3": b3}


def prepare_qnetwork_params(params):
    """Cast hidden-layer weights to the MXU compute dtype (bf16); keep the
    input layer and all biases in fp32.  No padding anywhere."""
    return {
        "w1": params["w1"].astype(jnp.float32),
        "b1": params["b1"].astype(jnp.float32),
        "w2": params["w2"].astype(jnp.bfloat16),
        "b2": params["b2"].astype(jnp.float32),
        "w3": params["w3"].astype(jnp.bfloat16),
        "b3": params["b3"].astype(jnp.float32),
    }


# --------------------------------------------------------------------------
# Plain-jnp path (same dtype recipe as the kernel) -- used as the small-batch
# fallback and as a tight reference for the Pallas path.
# --------------------------------------------------------------------------
def _jnp_forward(x, params):
    h1 = (
        jnp.dot(x.astype(jnp.float32), params["w1"], preferred_element_type=jnp.float32)
        + params["b1"]
    )
    h1 = jnp.maximum(h1.astype(jnp.bfloat16), 0)
    h2 = jnp.dot(h1, params["w2"], preferred_element_type=jnp.float32) + params["b2"]
    h2 = jnp.maximum(h2.astype(jnp.bfloat16), 0)
    return jnp.dot(h2, params["w3"], preferred_element_type=jnp.float32) + params["b3"]


def _ref_fp32(x, raw_params):
    """Full-fp32 reference matching the PyTorch module's semantics."""
    h1 = jnp.maximum(x @ raw_params["w1"] + raw_params["b1"], 0.0)
    h2 = jnp.maximum(h1 @ raw_params["w2"] + raw_params["b2"], 0.0)
    return h2 @ raw_params["w3"] + raw_params["b3"]


# --------------------------------------------------------------------------
# Forward wrapper
# --------------------------------------------------------------------------
def qnetwork_forward(x, params, *, block_b=1024, min_pallas_batch=256):
    """x: [B, state_size] fp32. Returns [B, action_size] fp32 Q-values."""
    w1, b1 = params["w1"], params["b1"]
    w2, b2 = params["w2"], params["b2"]
    w3, b3 = params["w3"], params["b3"]
    B, S = x.shape
    A = w3.shape[1]
    x = x.astype(jnp.float32)

    # Small act()-style batches are launch-latency bound: skip Pallas.
    if B < min_pallas_batch:
        return _jnp_forward(x, params)

    # Batch tile: big (default 1024 rows), multiple of 16 sublanes; if the
    # whole batch fits in one tile, use the exact batch size (block dim equal
    # to the full array dim is always legal and avoids any batch padding).
    tb = _round_up(min(block_b, B), 16)
    if tb >= B:
        tb = B
    n_steps = pl.cdiv(B, tb)

    # v7x: two TensorCores -> give them an even number (>=2) of parallel grid
    # steps once the batch is big enough to be worth splitting.
    if B >= 1024 and n_steps % 2 == 1:
        n_steps += 1
        tb = _round_up(pl.cdiv(B, n_steps), 16)
        n_steps = pl.cdiv(B, tb)

    const = lambda i: (0, 0)  # weights/biases: one VMEM-resident copy
    out = pl.pallas_call(
        qnetwork_kernel,
        out_shape=jax.ShapeDtypeStruct((B, A), jnp.float32),
        grid_spec=pltpu.PrefetchScalarGridSpec(
            num_scalar_prefetch=0,
            grid=(n_steps,),
            in_specs=[
                pl.BlockSpec((tb, S), lambda i: (i, 0)),  # x tiled over batch
                pl.BlockSpec(w1.shape, const),
                pl.BlockSpec(b1.shape, const),
                pl.BlockSpec(w2.shape, const),
                pl.BlockSpec(b2.shape, const),
                pl.BlockSpec(w3.shape, const),
                pl.BlockSpec(b3.shape, const),
            ],
            out_specs=pl.BlockSpec((tb, A), lambda i: (i, 0)),
        ),
        compiler_params=pltpu.CompilerParams(
            dimension_semantics=("parallel",),  # shard batch across v7x's 2 TCs
        ),
    )(x, w1, b1, w2, b2, w3, b3)
    return out


# --------------------------------------------------------------------------
# Self-test
# --------------------------------------------------------------------------
if __name__ == "__main__":
    # Banana env: state_size=37, action_size=4.
    STATE_SIZE, ACTION_SIZE = 37, 4

    key = jax.random.PRNGKey(0)
    kp, k1, k2, k3 = jax.random.split(key, 4)
    raw = init_qnetwork_params(kp, STATE_SIZE, ACTION_SIZE)
    params = prepare_qnetwork_params(raw)

    # 1) act()-style tiny batch -> plain-jnp fallback (launch-latency regime).
    x_small = jax.random.normal(k1, (8, STATE_SIZE), jnp.float32)
    out_small = jax.block_until_ready(qnetwork_forward(x_small, params))
    assert out_small.shape == (8, ACTION_SIZE)
    assert jnp.allclose(out_small, _ref_fp32(x_small, raw), atol=2e-2, rtol=2e-2)

    # 2) replay-buffer-sized batch -> Pallas kernel, single full-batch tile.
    x_mid = jax.random.normal(k2, (512, STATE_SIZE), jnp.float32)
    out_mid = jax.block_until_ready(qnetwork_forward(x_mid, params))
    assert out_mid.shape == (512, ACTION_SIZE)
    assert jnp.allclose(out_mid, _jnp_forward(x_mid, params), atol=5e-3, rtol=5e-3)
    assert jnp.allclose(out_mid, _ref_fp32(x_mid, raw), atol=2e-2, rtol=2e-2)

    # 3) Ragged batch with a multi-step grid: exercises the batch pipeline and
    #    boundary-block clipping (block_b=256 only to force >1 grid step at a
    #    small test size; production callers keep the 1024 default).
    x_big = jax.random.normal(k3, (700, STATE_SIZE), jnp.float32)
    out_big = jax.block_until_ready(qnetwork_forward(x_big, params, block_b=256))
    assert out_big.shape == (700, ACTION_SIZE)
    assert jnp.allclose(out_big, _jnp_forward(x_big, params), atol=5e-3, rtol=5e-3)
    assert jnp.allclose(out_big, _ref_fp32(x_big, raw), atol=2e-2, rtol=2e-2)

    print("KERNEL_OK")
</pallas_src>

<mosaic_0001>
module attributes {stable_mosaic.version = 11 : i64} {
  func.func @qnetwork_kernel(%arg0: i32, %arg1: memref<512x37xf32, #tpu.memory_space<vmem>>, %arg2: memref<37x64xf32, #tpu.memory_space<vmem>>, %arg3: memref<1x64xf32, #tpu.memory_space<vmem>>, %arg4: memref<64x64xbf16, #tpu.memory_space<vmem>>, %arg5: memref<1x64xf32, #tpu.memory_space<vmem>>, %arg6: memref<64x4xbf16, #tpu.memory_space<vmem>>, %arg7: memref<1x4xf32, #tpu.memory_space<vmem>>, %arg8: memref<512x4xf32, #tpu.memory_space<vmem>>) attributes {dimension_semantics = [#tpu.dimension_semantics<parallel>], iteration_bounds = array<i64: 1>, scalar_prefetch = 0 : i64, scratch_operands = 0 : i64, tpu.core_type = #tpu.core_type<tc>, window_params = [{transform_indices = @transform_0, window_bounds = array<i64: 512, 37>}, {pipeline_mode = #tpu.pipeline_mode<synchronous>, transform_indices = @transform_1, window_bounds = array<i64: 37, 64>}, {pipeline_mode = #tpu.pipeline_mode<synchronous>, transform_indices = @transform_2, window_bounds = array<i64: 1, 64>}, {pipeline_mode = #tpu.pipeline_mode<synchronous>, transform_indices = @transform_3, window_bounds = array<i64: 64, 64>}, {pipeline_mode = #tpu.pipeline_mode<synchronous>, transform_indices = @transform_4, window_bounds = array<i64: 1, 64>}, {pipeline_mode = #tpu.pipeline_mode<synchronous>, transform_indices = @transform_5, window_bounds = array<i64: 64, 4>}, {pipeline_mode = #tpu.pipeline_mode<synchronous>, transform_indices = @transform_6, window_bounds = array<i64: 1, 4>}, {transform_indices = @transform_7, window_bounds = array<i64: 512, 4>}]} {
    %c0 = arith.constant 0 : index
    %c0_0 = arith.constant 0 : index
    %0 = vector.load %arg1[%c0, %c0_0] : memref<512x37xf32, #tpu.memory_space<vmem>>, vector<512x37xf32>
    %c0_1 = arith.constant 0 : index
    %c0_2 = arith.constant 0 : index
    %1 = vector.load %arg2[%c0_1, %c0_2] : memref<37x64xf32, #tpu.memory_space<vmem>>, vector<37x64xf32>
    %cst = arith.constant dense<0.000000e+00> : vector<512x64xf32>
    %2 = tpu.matmul %0, %1, %cst {dimension_numbers = #tpu.dot_dimension_numbers<[1], [0], [0], [1], [0, 0, 1, 1], [], []>} : vector<512x37xf32>, vector<37x64xf32>, vector<512x64xf32> -> vector<512x64xf32>
    %c0_3 = arith.constant 0 : index
    %c0_4 = arith.constant 0 : index
    %3 = vector.load %arg3[%c0_3, %c0_4] : memref<1x64xf32, #tpu.memory_space<vmem>>, vector<1x64xf32>
    %4 = vector.broadcast %3 : vector<1x64xf32> to vector<512x64xf32>
    %5 = arith.addf %2, %4 : vector<512x64xf32>
    %6 = arith.truncf %5 : vector<512x64xf32> to vector<512x64xbf16>
    %cst_5 = arith.constant 0.000000e+00 : bf16
    %7 = vector.broadcast %cst_5 : bf16 to vector<512x64xbf16>
    %8 = arith.maximumf %6, %7 : vector<512x64xbf16>
    %c0_6 = arith.constant 0 : index
    %c0_7 = arith.constant 0 : index
    %9 = vector.load %arg4[%c0_6, %c0_7] : memref<64x64xbf16, #tpu.memory_space<vmem>>, vector<64x64xbf16>
    %cst_8 = arith.constant dense<0.000000e+00> : vector<512x64xf32>
    %10 = tpu.matmul %8, %9, %cst_8 {dimension_numbers = #tpu.dot_dimension_numbers<[1], [0], [0], [1], [0, 0, 1, 1], [], []>} : vector<512x64xbf16>, vector<64x64xbf16>, vector<512x64xf32> -> vector<512x64xf32>
    %c0_9 = arith.constant 0 : index
    %c0_10 = arith.constant 0 : index
    %11 = vector.load %arg5[%c0_9, %c0_10] : memref<1x64xf32, #tpu.memory_space<vmem>>, vector<1x64xf32>
    %12 = vector.broadcast %11 : vector<1x64xf32> to vector<512x64xf32>
    %13 = arith.addf %10, %12 : vector<512x64xf32>
    %14 = arith.truncf %13 : vector<512x64xf32> to vector<512x64xbf16>
    %cst_11 = arith.constant 0.000000e+00 : bf16
    %15 = vector.broadcast %cst_11 : bf16 to vector<512x64xbf16>
    %16 = arith.maximumf %14, %15 : vector<512x64xbf16>
    %c0_12 = arith.constant 0 : index
    %c0_13 = arith.constant 0 : index
    %17 = vector.load %arg6[%c0_12, %c0_13] : memref<64x4xbf16, #tpu.memory_space<vmem>>, vector<64x4xbf16>
    %cst_14 = arith.constant dense<0.000000e+00> : vector<512x4xf32>
    %18 = tpu.matmul %16, %17, %cst_14 {dimension_numbers = #tpu.dot_dimension_numbers<[1], [0], [0], [1], [0, 0, 1, 1], [], []>} : vector<512x64xbf16>, vector<64x4xbf16>, vector<512x4xf32> -> vector<512x4xf32>
    %c0_15 = arith.constant 0 : index
    %c0_16 = arith.constant 0 : index
    %19 = vector.load %arg7[%c0_15, %c0_16] : memref<1x4xf32, #tpu.memory_space<vmem>>, vector<1x4xf32>
    %20 = vector.broadcast %19 : vector<1x4xf32> to vector<512x4xf32>
    %21 = arith.addf %18, %20 : vector<512x4xf32>
    %c0_17 = arith.constant 0 : index
    %c0_18 = arith.constant 0 : index
    %22 = vector.load %arg8[%c0_17, %c0_18] : memref<512x4xf32, #tpu.memory_space<vmem>>, vector<512x4xf32>
    tpu.vector_store %arg8[%c0_17, %c0_18], %21 {strides = array<i32>} : memref<512x4xf32, #tpu.memory_space<vmem>>, vector<512x4xf32>,
    return
  }
  func.func @transform_0(%arg0: i32) -> (i32, i32) {
    %c0_i32 = arith.constant 0 : i32
    %c0_i32_0 = arith.constant 0 : i32
    return %arg0, %c0_i32 : i32, i32
  }
  func.func @transform_1(%arg0: i32) -> (i32, i32) {
    %c0_i32 = arith.constant 0 : i32
    %c0_i32_0 = arith.constant 0 : i32
    %c0_i32_1 = arith.constant 0 : i32
    return %c0_i32, %c0_i32_0 : i32, i32
  }
  func.func @transform_2(%arg0: i32) -> (i32, i32) {
    %c0_i32 = arith.constant 0 : i32
    %c0_i32_0 = arith.constant 0 : i32
    %c0_i32_1 = arith.constant 0 : i32
    return %c0_i32, %c0_i32_0 : i32, i32
  }
  func.func @transform_3(%arg0: i32) -> (i32, i32) {
    %c0_i32 = arith.constant 0 : i32
    %c0_i32_0 = arith.constant 0 : i32
    %c0_i32_1 = arith.constant 0 : i32
    return %c0_i32, %c0_i32_0 : i32, i32
  }
  func.func @transform_4(%arg0: i32) -> (i32, i32) {
    %c0_i32 = arith.constant 0 : i32
    %c0_i32_0 = arith.constant 0 : i32
    %c0_i32_1 = arith.constant 0 : i32
    return %c0_i32, %c0_i32_0 : i32, i32
  }
  func.func @transform_5(%arg0: i32) -> (i32, i32) {
    %c0_i32 = arith.constant 0 : i32
    %c0_i32_0 = arith.constant 0 : i32
    %c0_i32_1 = arith.constant 0 : i32
    return %c0_i32, %c0_i32_0 : i32, i32
  }
  func.func @transform_6(%arg0: i32) -> (i32, i32) {
    %c0_i32 = arith.constant 0 : i32
    %c0_i32_0 = arith.constant 0 : i32
    %c0_i32_1 = arith.constant 0 : i32
    return %c0_i32, %c0_i32_0 : i32, i32
  }
  func.func @transform_7(%arg0: i32) -> (i32, i32) {
    %c0_i32 = arith.constant 0 : i32
    %c0_i32_0 = arith.constant 0 : i32
    return %arg0, %c0_i32 : i32, i32
  }
}

</mosaic_0001>

<llo_original>
// kernel: tpu_custom_call.1
$region0: #{tpu_custom_call.1}
  #allocation0 [shape = 'u32[]', space=smem, size = 0x4, offset = 0x4, fixed_abs, tag = 'smem constant byte address 0x4 - core index']
  #allocation1 [shape = 'u32[144,128]{1,0:T(1,128)}', space=vmem, size = 0x12000, scoped, tag = 'internal scratch']
  %s0 = inlined_call_operand.vmem [shape: f32[512,37], index: 0, kind: input, shape index: {}]
  %s1 = inlined_call_operand.vmem [shape: f32[37,64], index: 1, kind: input, shape index: {}]
  %s2 = inlined_call_operand.vmem [shape: f32[1,64], index: 2, kind: input, shape index: {}]
  %s3 = inlined_call_operand.vmem [shape: bf16[64,64], index: 3, kind: input, shape index: {}]
  %s4 = inlined_call_operand.vmem [shape: f32[1,64], index: 4, kind: input, shape index: {}]
  %s5 = inlined_call_operand.vmem [shape: bf16[64,4], index: 5, kind: input, shape index: {}]
  %s6 = inlined_call_operand.vmem [shape: f32[1,4], index: 6, kind: input, shape index: {}]
  %s7 = inlined_call_operand.vmem [shape: f32[512,4], index: 7, kind: output, shape index: {}]
  %s8 = sld [smem:[#allocation0]]
  $region38: #{tpu_custom_call.1} parent=0
    _
  %s10 = ssub.s32 1, %s8
  %s11 = scalar_select 0, %s10, %s8
  // Predicated region
  $region2: #{tpu_custom_call.1} parent=0 // pred_check
    _
  $region3: #{tpu_custom_call.1} parent=0 // pred_check_branch
    %13 = sbr.rel (0) target = $region5
  $region4: #{tpu_custom_call.1} parent=0 // pred_region
    _
  $region5: #{tpu_custom_call.1} parent=0 // pred_fallthru
    _
  // Predicated region
  $region6: #{tpu_custom_call.1} parent=0 // pred_check
    _
  $region7: #{tpu_custom_call.1} parent=0 // pred_check_branch
    %15 = sbr.rel (0) target = $region9
  $region8: #{tpu_custom_call.1} parent=0 // pred_region
    _
  $region9: #{tpu_custom_call.1} parent=0 // pred_fallthru
    _
  // Predicated region
  $region10: #{tpu_custom_call.1} parent=0 // pred_check
    _
  $region11: #{tpu_custom_call.1} parent=0 // pred_check_branch
    %17 = sbr.rel (0) target = $region13
  $region12: #{tpu_custom_call.1} parent=0 // pred_region
    _
  $region13: #{tpu_custom_call.1} parent=0 // pred_fallthru
    _
  // Predicated region
  $region14: #{tpu_custom_call.1} parent=0 // pred_check
    _
  $region15: #{tpu_custom_call.1} parent=0 // pred_check_branch
    %19 = sbr.rel (0) target = $region17
  $region16: #{tpu_custom_call.1} parent=0 // pred_region
    _
  $region17: #{tpu_custom_call.1} parent=0 // pred_fallthru
    _
  // Predicated region
  $region18: #{tpu_custom_call.1} parent=0 // pred_check
    _
  $region19: #{tpu_custom_call.1} parent=0 // pred_check_branch
    %21 = sbr.rel (0) target = $region21
  $region20: #{tpu_custom_call.1} parent=0 // pred_region
    _
  $region21: #{tpu_custom_call.1} parent=0 // pred_fallthru
    _
  // Predicated region
  $region22: #{tpu_custom_call.1} parent=0 // pred_check
    _
  $region23: #{tpu_custom_call.1} parent=0 // pred_check_branch
    %23 = sbr.rel (0) target = $region25
  $region24: #{tpu_custom_call.1} parent=0 // pred_region
    _
  $region25: #{tpu_custom_call.1} parent=0 // pred_fallthru
    _
  // Predicated region
  $region26: #{tpu_custom_call.1} parent=0 // pred_check
    _
  $region27: #{tpu_custom_call.1} parent=0 // pred_check_branch
    %25 = sbr.rel (0) target = $region29
  $region28: #{tpu_custom_call.1} parent=0 // pred_region
    _
  $region29: #{tpu_custom_call.1} parent=0 // pred_fallthru
    _
  %v27 = vld [vmem:[%s0] sm:$0xff]
  %v28 = vld [vmem:[%s0 + $0x8] sm:$0xff]
  %v29 = vld [vmem:[%s0 + $0x10] sm:$0xff]
  %v30 = vld [vmem:[%s0 + $0x18] sm:$0xff]
  %v31 = vld [vmem:[%s0 + $0x20] sm:$0xff]
  %v32 = vld [vmem:[%s0 + $0x28] sm:$0xff]
  %v33 = vld [vmem:[%s0 + $0x30] sm:$0xff]
  %v34 = vld [vmem:[%s0 + $0x38] sm:$0xff]
  %v35 = vld [vmem:[%s0 + $0x40] sm:$0xff]
  %v36 = vld [vmem:[%s0 + $0x48] sm:$0xff]
  %v37 = vld [vmem:[%s0 + $0x50] sm:$0xff]
  %v38 = vld [vmem:[%s0 + $0x58] sm:$0xff]
  %v39 = vld [vmem:[%s0 + $0x60] sm:$0xff]
  %v40 = vld [vmem:[%s0 + $0x68] sm:$0xff]
  %v41 = vld [vmem:[%s0 + $0x70] sm:$0xff]
  %v42 = vld [vmem:[%s0 + $0x78] sm:$0xff]
  %v43 = vld [vmem:[%s0 + $0x80] sm:$0xff]
  %v44 = vld [vmem:[%s0 + $0x88] sm:$0xff]
  %v45 = vld [vmem:[%s0 + $0x90] sm:$0xff]
  %v46 = vld [vmem:[%s0 + $0x98] sm:$0xff]
  %v47 = vld [vmem:[%s0 + $0xa0] sm:$0xff]
  %v48 = vld [vmem:[%s0 + $0xa8] sm:$0xff]
  %v49 = vld [vmem:[%s0 + $0xb0] sm:$0xff]
  %v50 = vld [vmem:[%s0 + $0xb8] sm:$0xff]
  %v51 = vld [vmem:[%s0 + $0xc0] sm:$0xff]
  %v52 = vld [vmem:[%s0 + $0xc8] sm:$0xff]
  %v53 = vld [vmem:[%s0 + $0xd0] sm:$0xff]
  %v54 = vld [vmem:[%s0 + $0xd8] sm:$0xff]
  %v55 = vld [vmem:[%s0 + $0xe0] sm:$0xff]
  %v56 = vld [vmem:[%s0 + $0xe8] sm:$0xff]
  %v57 = vld [vmem:[%s0 + $0xf0] sm:$0xff]
  %v58 = vld [vmem:[%s0 + $0xf8] sm:$0xff]
  %v59 = vld [vmem:[%s0 + $0x100] sm:$0xff]
  %v60 = vld [vmem:[%s0 + $0x108] sm:$0xff]
  %v61 = vld [vmem:[%s0 + $0x110] sm:$0xff]
  %v62 = vld [vmem:[%s0 + $0x118] sm:$0xff]
  %v63 = vld [vmem:[%s0 + $0x120] sm:$0xff]
  %v64 = vld [vmem:[%s0 + $0x128] sm:$0xff]
  %v65 = vld [vmem:[%s0 + $0x130] sm:$0xff]
  %v66 = vld [vmem:[%s0 + $0x138] sm:$0xff]
  %v67 = vld [vmem:[%s0 + $0x140] sm:$0xff]
  %v68 = vld [vmem:[%s0 + $0x148] sm:$0xff]
  %v69 = vld [vmem:[%s0 + $0x150] sm:$0xff]
  %v70 = vld [vmem:[%s0 + $0x158] sm:$0xff]
  %v71 = vld [vmem:[%s0 + $0x160] sm:$0xff]
  %v72 = vld [vmem:[%s0 + $0x168] sm:$0xff]
  %v73 = vld [vmem:[%s0 + $0x170] sm:$0xff]
  %v74 = vld [vmem:[%s0 + $0x178] sm:$0xff]
  %v75 = vld [vmem:[%s0 + $0x180] sm:$0xff]
  %v76 = vld [vmem:[%s0 + $0x188] sm:$0xff]
  %v77 = vld [vmem:[%s0 + $0x190] sm:$0xff]
  %v78 = vld [vmem:[%s0 + $0x198] sm:$0xff]
  %v79 = vld [vmem:[%s0 + $0x1a0] sm:$0xff]
  %v80 = vld [vmem:[%s0 + $0x1a8] sm:$0xff]
  %v81 = vld [vmem:[%s0 + $0x1b0] sm:$0xff]
  %v82 = vld [vmem:[%s0 + $0x1b8] sm:$0xff]
  %v83 = vld [vmem:[%s0 + $0x1c0] sm:$0xff]
  %v84 = vld [vmem:[%s0 + $0x1c8] sm:$0xff]
  %v85 = vld [vmem:[%s0 + $0x1d0] sm:$0xff]
  %v86 = vld [vmem:[%s0 + $0x1d8] sm:$0xff]
  %v87 = vld [vmem:[%s0 + $0x1e0] sm:$0xff]
  %v88 = vld [vmem:[%s0 + $0x1e8] sm:$0xff]
  %v89 = vld [vmem:[%s0 + $0x1f0] sm:$0xff]
  %v90 = vld [vmem:[%s0 + $0x1f8] sm:$0xff]
  %v91 = vld [vmem:[%s1] sm:$0xff]
  %v92 = vld [vmem:[%s1 + $0x8] sm:$0xff]
  %v93 = vld [vmem:[%s1 + $0x10] sm:$0xff]
  %v94 = vld [vmem:[%s1 + $0x18] sm:$0xff]
  %v95 = vld [vmem:[%s1 + $0x20] sm:$0x1f]
  %v96 = vld [vmem:[%s2] sm:$0x1]
  %v98 = vlaneseq
  %v99 = vshrl.u32 %v98, 7
  %v100 = vsub.s32 0, %v99
  %v101 = vrot.slane %v96, %v100
  %vm103 = vcmask 302080
  %v105 = vsel %vm103, %v27, 0
  %v108 = vsel %vm103, %v28, 0
  %v111 = vsel %vm103, %v29, 0
  %v114 = vsel %vm103, %v30, 0
  %v117 = vsel %vm103, %v31, 0
  %v120 = vsel %vm103, %v32, 0
  %v123 = vsel %vm103, %v33, 0
  %v126 = vsel %vm103, %v34, 0
  %v129 = vsel %vm103, %v35, 0
  %v132 = vsel %vm103, %v36, 0
  %v135 = vsel %vm103, %v37, 0
  %v138 = vsel %vm103, %v38, 0
  %v141 = vsel %vm103, %v39, 0
  %v144 = vsel %vm103, %v40, 0
  %v147 = vsel %vm103, %v41, 0
  %v150 = vsel %vm103, %v42, 0
  %v153 = vsel %vm103, %v43, 0
  %v156 = vsel %vm103, %v44, 0
  %v159 = vsel %vm103, %v45, 0
  %v162 = vsel %vm103, %v46, 0
  %v165 = vsel %vm103, %v47, 0
  %v168 = vsel %vm103, %v48, 0
  %v171 = vsel %vm103, %v49, 0
  %v174 = vsel %vm103, %v50, 0
  %v177 = vsel %vm103, %v51, 0
  %v180 = vsel %vm103, %v52, 0
  %v183 = vsel %vm103, %v53, 0
  %v186 = vsel %vm103, %v54, 0
  %v189 = vsel %vm103, %v55, 0
  %v192 = vsel %vm103, %v56, 0
  %v195 = vsel %vm103, %v57, 0
  %v198 = vsel %vm103, %v58, 0
  %v201 = vsel %vm103, %v59, 0
  %v204 = vsel %vm103, %v60, 0
  %v207 = vsel %vm103, %v61, 0
  %v210 = vsel %vm103, %v62, 0
  %v213 = vsel %vm103, %v63, 0
  %v216 = vsel %vm103, %v64, 0
  %v219 = vsel %vm103, %v65, 0
  %v222 = vsel %vm103, %v66, 0
  %v225 = vsel %vm103, %v67, 0
  %v228 = vsel %vm103, %v68, 0
  %v231 = vsel %vm103, %v69, 0
  %v234 = vsel %vm103, %v70, 0
  %v237 = vsel %vm103, %v71, 0
  %v240 = vsel %vm103, %v72, 0
  %v243 = vsel %vm103, %v73, 0
  %v246 = vsel %vm103, %v74, 0
  %v249 = vsel %vm103, %v75, 0
  %v252 = vsel %vm103, %v76, 0
  %v255 = vsel %vm103, %v77, 0
  %v258 = vsel %vm103, %v78, 0
  %v261 = vsel %vm103, %v79, 0
  %v264 = vsel %vm103, %v80, 0
  %v267 = vsel %vm103, %v81, 0
  %v270 = vsel %vm103, %v82, 0
  %v273 = vsel %vm103, %v83, 0
  %v276 = vsel %vm103, %v84, 0
  %v279 = vsel %vm103, %v85, 0
  %v282 = vsel %vm103, %v86, 0
  %v285 = vsel %vm103, %v87, 0
  %v288 = vsel %vm103, %v88, 0
  %v291 = vsel %vm103, %v89, 0
  %v294 = vsel %vm103, %v90, 0
  %vm296 = vcmask 1044480
  %v298 = vsel %vm296, %v95, 0
  %300 = vmatprep.subr.mxu0 0.0
  %301 = vmatpush1.msra.mxu0 0.0
  %302 = vmatprep.subr.mxu0 0.0
  %303 = vmatpush1.msra.mxu0 0.0
  %304 = vmatprep.subr.mxu0 0.0
  %305 = vmatpush1.msra.mxu0 0.0
  %306 = vmatprep.subr.mxu0 0.0
  %307 = vmatpush1.msra.mxu0 0.0
  %308 = vmatprep.subr.mxu0 0.0
  %309 = vmatpush1.msra.mxu0 0.0
  %310 = vmatprep.subr.mxu0 0.0
  %311 = vmatpush1.msra.mxu0 0.0
  %312 = vmatprep.subr.mxu0 0.0
  %313 = vmatpush1.msra.mxu0 0.0
  %314 = vmatprep.subr.mxu0 0.0
  %315 = vmatpush1.msra.mxu0 0.0
  %316 = vmatprep.subr.mxu0 0.0
  %317 = vmatpush1.msra.mxu0 0.0
  %318 = vmatprep.subr.mxu0 0.0
  %319 = vmatpush1.msra.mxu0 0.0
  %320 = vmatprep.subr.mxu0 0.0
  %321 = vmatpush1.msra.mxu0 0.0
  %322 = vmatprep.subr.mxu0 0.0
  %323 = vmatpush1.msra.mxu0 %v298
  %324 = vmatprep.subr.mxu0 0.0
  %325 = vmatpush1.msra.mxu0 %v94
  %326 = vmatprep.subr.mxu0 0.0
  %327 = vmatpush1.msra.mxu0 %v93
  %328 = vmatprep.subr.mxu0 0.0
  %329 = vmatpush1.msra.mxu0 %v92
  %330 = vmatprep.subr.mxu0 0.0
  %331 = vmatpush1.msra.mxu0 %v91
  %332 = vmatprep.subr.mxu0 0.0
  %333 = vmatpush2.msra.mxu0 0.0
  %334 = vmatprep.subr.mxu0 0.0
  %335 = vmatpush2.msra.mxu0 0.0
  %336 = vmatprep.subr.mxu0 0.0
  %337 = vmatpush2.msra.mxu0 0.0
  %338 = vmatprep.subr.mxu0 0.0
  %339 = vmatpush2.msra.mxu0 0.0
  %340 = vmatprep.subr.mxu0 0.0
  %341 = vmatpush2.msra.mxu0 0.0
  %342 = vmatprep.subr.mxu0 0.0
  %343 = vmatpush2.msra.mxu0 0.0
  %344 = vmatprep.subr.mxu0 0.0
  %345 = vmatpush2.msra.mxu0 0.0
  %346 = vmatprep.subr.mxu0 0.0
  %347 = vmatpush2.msra.mxu0 0.0
  %348 = vmatprep.subr.mxu0 0.0
  %349 = vmatpush2.msra.mxu0 0.0
  %350 = vmatprep.subr.mxu0 0.0
  %351 = vmatpush2.msra.mxu0 0.0
  %352 = vmatprep.subr.mxu0 0.0
  %353 = vmatpush2.msra.mxu0 0.0
  %354 = vmatprep.subr.mxu0 0.0
  %355 = vmatpush2.msra.mxu0 0.0
  %356 = vmatprep.subr.mxu0 0.0
  %357 = vmatpush2.msra.mxu0 0.0
  %358 = vmatprep.subr.mxu0 0.0
  %359 = vmatpush2.msra.mxu0 0.0
  %360 = vmatprep.subr.mxu0 0.0
  %361 = vmatpush2.msra.mxu0 0.0
  %362 = vmatprep.subr.mxu0 0.0
  %363 = vmatpush2.msra.mxu0 0.0
  %364 = vmatprep.mubr.f32.mxu0 0.0
  %365 = vmatmul.mubr.f32.gmra.mxu0 %v105
  %v366 = vpop.f32.mrf.mxu0
  %v367 = vadd.f32 %v101, %v366
  %v368 = vpop.f32.mrf.mxu0
  %369 = vmatprep.mubr.f32.mxu0 0.0
  %370 = vmatmul.mubr.f32.gmra.mxu0 %v108
  %v371 = vpop.f32.mrf.mxu0
  %v372 = vadd.f32 %v101, %v371
  %v373 = vpop.f32.mrf.mxu0
  %374 = vmatprep.mubr.f32.mxu0 0.0
  %375 = vmatmul.mubr.f32.gmra.mxu0 %v111
  %v376 = vpop.f32.mrf.mxu0
  %v377 = vadd.f32 %v101, %v376
  %v378 = vpop.f32.mrf.mxu0
  %379 = vmatprep.mubr.f32.mxu0 0.0
  %380 = vmatmul.mubr.f32.gmra.mxu0 %v114
  %v381 = vpop.f32.mrf.mxu0
  %v382 = vadd.f32 %v101, %v381
  %v383 = vpop.f32.mrf.mxu0
  %384 = vmatprep.mubr.f32.mxu0 0.0
  %385 = vmatmul.mubr.f32.gmra.mxu0 %v117
  %v386 = vpop.f32.mrf.mxu0
  %v387 = vadd.f32 %v101, %v386
  %v388 = vpop.f32.mrf.mxu0
  %389 = vmatprep.mubr.f32.mxu0 0.0
  %390 = vmatmul.mubr.f32.gmra.mxu0 %v120
  %v391 = vpop.f32.mrf.mxu0
  %v392 = vadd.f32 %v101, %v391
  %v393 = vpop.f32.mrf.mxu0
  %394 = vmatprep.mubr.f32.mxu0 0.0
  %395 = vmatmul.mubr.f32.gmra.mxu0 %v123
  %v396 = vpop.f32.mrf.mxu0
  %v397 = vadd.f32 %v101, %v396
  %v398 = vpop.f32.mrf.mxu0
  %399 = vmatprep.mubr.f32.mxu0 0.0
  %400 = vmatmul.mubr.f32.gmra.mxu0 %v126
  %v401 = vpop.f32.mrf.mxu0
  %v402 = vadd.f32 %v101, %v401
  %v403 = vpop.f32.mrf.mxu0
  %404 = vmatprep.mubr.f32.mxu0 0.0
  %405 = vmatmul.mubr.f32.gmra.mxu0 %v129
  %v406 = vpop.f32.mrf.mxu0
  %v407 = vadd.f32 %v101, %v406
  %v408 = vpop.f32.mrf.mxu0
  %409 = vmatprep.mubr.f32.mxu0 0.0
  %410 = vmatmul.mubr.f32.gmra.mxu0 %v132
  %v411 = vpop.f32.mrf.mxu0
  %v412 = vadd.f32 %v101, %v411
  %v413 = vpop.f32.mrf.mxu0
  %414 = vmatprep.mubr.f32.mxu0 0.0
  %415 = vmatmul.mubr.f32.gmra.mxu0 %v135
  %v416 = vpop.f32.mrf.mxu0
  %v417 = vadd.f32 %v101, %v416
  %v418 = vpop.f32.mrf.mxu0
  %419 = vmatprep.mubr.f32.mxu0 0.0
  %420 = vmatmul.mubr.f32.gmra.mxu0 %v138
  %v421 = vpop.f32.mrf.mxu0
  %v422 = vadd.f32 %v101, %v421
  %v423 = vpop.f32.mrf.mxu0
  %424 = vmatprep.mubr.f32.mxu0 0.0
  %425 = vmatmul.mubr.f32.gmra.mxu0 %v141
  %v426 = vpop.f32.mrf.mxu0
  %v427 = vadd.f32 %v101, %v426
  %v428 = vpop.f32.mrf.mxu0
  %429 = vmatprep.mubr.f32.mxu0 0.0
  %430 = vmatmul.mubr.f32.gmra.mxu0 %v144
  %v431 = vpop.f32.mrf.mxu0
  %v432 = vadd.f32 %v101, %v431
  %v433 = vpop.f32.mrf.mxu0
  %434 = vmatprep.mubr.f32.mxu0 0.0
  %435 = vmatmul.mubr.f32.gmra.mxu0 %v147
  %v436 = vpop.f32.mrf.mxu0
  %v437 = vadd.f32 %v101, %v436
  %v438 = vpop.f32.mrf.mxu0
  %439 = vmatprep.mubr.f32.mxu0 0.0
  %440 = vmatmul.mubr.f32.gmra.mxu0 %v150
  %v441 = vpop.f32.mrf.mxu0
  %v442 = vadd.f32 %v101, %v441
  %v443 = vpop.f32.mrf.mxu0
  %444 = vmatprep.mubr.f32.mxu0 0.0
  %445 = vmatmul.mubr.f32.gmra.mxu0 %v153
  %v446 = vpop.f32.mrf.mxu0
  %v447 = vadd.f32 %v101, %v446
  %v448 = vpop.f32.mrf.mxu0
  %449 = vmatprep.mubr.f32.mxu0 0.0
  %450 = vmatmul.mubr.f32.gmra.mxu0 %v156
  %v451 = vpop.f32.mrf.mxu0
  %v452 = vadd.f32 %v101, %v451
  %v453 = vpop.f32.mrf.mxu0
  %454 = vmatprep.mubr.f32.mxu0 0.0
  %455 = vmatmul.mubr.f32.gmra.mxu0 %v159
  %v456 = vpop.f32.mrf.mxu0
  %v457 = vadd.f32 %v101, %v456
  %v458 = vpop.f32.mrf.mxu0
  %459 = vmatprep.mubr.f32.mxu0 0.0
  %460 = vmatmul.mubr.f32.gmra.mxu0 %v162
  %v461 = vpop.f32.mrf.mxu0
  %v462 = vadd.f32 %v101, %v461
  %v463 = vpop.f32.mrf.mxu0
  %464 = vmatprep.mubr.f32.mxu0 0.0
  %465 = vmatmul.mubr.f32.gmra.mxu0 %v165
  %v466 = vpop.f32.mrf.mxu0
  %v467 = vadd.f32 %v101, %v466
  %v468 = vpop.f32.mrf.mxu0
  %469 = vmatprep.mubr.f32.mxu0 0.0
  %470 = vmatmul.mubr.f32.gmra.mxu0 %v168
  %v471 = vpop.f32.mrf.mxu0
  %v472 = vadd.f32 %v101, %v471
  %v473 = vpop.f32.mrf.mxu0
  %474 = vmatprep.mubr.f32.mxu0 0.0
  %475 = vmatmul.mubr.f32.gmra.mxu0 %v171
  %v476 = vpop.f32.mrf.mxu0
  %v477 = vadd.f32 %v101, %v476
  %v478 = vpop.f32.mrf.mxu0
  %479 = vmatprep.mubr.f32.mxu0 0.0
  %480 = vmatmul.mubr.f32.gmra.mxu0 %v174
  %v481 = vpop.f32.mrf.mxu0
  %v482 = vadd.f32 %v101, %v481
  %v483 = vpop.f32.mrf.mxu0
  %484 = vmatprep.mubr.f32.mxu0 0.0
  %485 = vmatmul.mubr.f32.gmra.mxu0 %v177
  %v486 = vpop.f32.mrf.mxu0
  %v487 = vadd.f32 %v101, %v486
  %v488 = vpop.f32.mrf.mxu0
  %489 = vmatprep.mubr.f32.mxu0 0.0
  %490 = vmatmul.mubr.f32.gmra.mxu0 %v180
  %v491 = vpop.f32.mrf.mxu0
  %v492 = vadd.f32 %v101, %v491
  %v493 = vpop.f32.mrf.mxu0
  %494 = vmatprep.mubr.f32.mxu0 0.0
  %495 = vmatmul.mubr.f32.gmra.mxu0 %v183
  %v496 = vpop.f32.mrf.mxu0
  %v497 = vadd.f32 %v101, %v496
  %v498 = vpop.f32.mrf.mxu0
  %499 = vmatprep.mubr.f32.mxu0 0.0
  %500 = vmatmul.mubr.f32.gmra.mxu0 %v186
  %v501 = vpop.f32.mrf.mxu0
  %v502 = vadd.f32 %v101, %v501
  %v503 = vpop.f32.mrf.mxu0
  %504 = vmatprep.mubr.f32.mxu0 0.0
  %505 = vmatmul.mubr.f32.gmra.mxu0 %v189
  %v506 = vpop.f32.mrf.mxu0
  %v507 = vadd.f32 %v101, %v506
  %v508 = vpop.f32.mrf.mxu0
  %509 = vmatprep.mubr.f32.mxu0 0.0
  %510 = vmatmul.mubr.f32.gmra.mxu0 %v192
  %v511 = vpop.f32.mrf.mxu0
  %v512 = vadd.f32 %v101, %v511
  %v513 = vpop.f32.mrf.mxu0
  %514 = vmatprep.mubr.f32.mxu0 0.0
  %515 = vmatmul.mubr.f32.gmra.mxu0 %v195
  %v516 = vpop.f32.mrf.mxu0
  %v517 = vadd.f32 %v101, %v516
  %v518 = vpop.f32.mrf.mxu0
  %519 = vmatprep.mubr.f32.mxu0 0.0
  %520 = vmatmul.mubr.f32.gmra.mxu0 %v198
  %v521 = vpop.f32.mrf.mxu0
  %v522 = vadd.f32 %v101, %v521
  %v523 = vpop.f32.mrf.mxu0
  %524 = vmatprep.mubr.f32.mxu0 0.0
  %525 = vmatmul.mubr.f32.gmra.mxu0 %v201
  %v526 = vpop.f32.mrf.mxu0
  %v527 = vadd.f32 %v101, %v526
  %v528 = vpop.f32.mrf.mxu0
  %529 = vmatprep.mubr.f32.mxu0 0.0
  %530 = vmatmul.mubr.f32.gmra.mxu0 %v204
  %v531 = vpop.f32.mrf.mxu0
  %v532 = vadd.f32 %v101, %v531
  %v533 = vpop.f32.mrf.mxu0
  %534 = vmatprep.mubr.f32.mxu0 0.0
  %535 = vmatmul.mubr.f32.gmra.mxu0 %v207
  %v536 = vpop.f32.mrf.mxu0
  %v537 = vadd.f32 %v101, %v536
  %v538 = vpop.f32.mrf.mxu0
  %539 = vmatprep.mubr.f32.mxu0 0.0
  %540 = vmatmul.mubr.f32.gmra.mxu0 %v210
  %v541 = vpop.f32.mrf.mxu0
  %v542 = vadd.f32 %v101, %v541
  %v543 = vpop.f32.mrf.mxu0
  %544 = vmatprep.mubr.f32.mxu0 0.0
  %545 = vmatmul.mubr.f32.gmra.mxu0 %v213
  %v546 = vpop.f32.mrf.mxu0
  %v547 = vadd.f32 %v101, %v546
  %v548 = vpop.f32.mrf.mxu0
  %549 = vmatprep.mubr.f32.mxu0 0.0
  %550 = vmatmul.mubr.f32.gmra.mxu0 %v216
  %v551 = vpop.f32.mrf.mxu0
  %v552 = vadd.f32 %v101, %v551
  %v553 = vpop.f32.mrf.mxu0
  %554 = vmatprep.mubr.f32.mxu0 0.0
  %555 = vmatmul.mubr.f32.gmra.mxu0 %v219
  %v556 = vpop.f32.mrf.mxu0
  %v557 = vadd.f32 %v101, %v556
  %v558 = vpop.f32.mrf.mxu0
  %559 = vmatprep.mubr.f32.mxu0 0.0
  %560 = vmatmul.mubr.f32.gmra.mxu0 %v222
  %v561 = vpop.f32.mrf.mxu0
  %v562 = vadd.f32 %v101, %v561
  %v563 = vpop.f32.mrf.mxu0
  %564 = vmatprep.mubr.f32.mxu0 0.0
  %565 = vmatmul.mubr.f32.gmra.mxu0 %v225
  %v566 = vpop.f32.mrf.mxu0
  %v567 = vadd.f32 %v101, %v566
  %v568 = vpop.f32.mrf.mxu0
  %569 = vmatprep.mubr.f32.mxu0 0.0
  %570 = vmatmul.mubr.f32.gmra.mxu0 %v228
  %v571 = vpop.f32.mrf.mxu0
  %v572 = vadd.f32 %v101, %v571
  %v573 = vpop.f32.mrf.mxu0
  %574 = vmatprep.mubr.f32.mxu0 0.0
  %575 = vmatmul.mubr.f32.gmra.mxu0 %v231
  %v576 = vpop.f32.mrf.mxu0
  %v577 = vadd.f32 %v101, %v576
  %v578 = vpop.f32.mrf.mxu0
  %579 = vmatprep.mubr.f32.mxu0 0.0
  %580 = vmatmul.mubr.f32.gmra.mxu0 %v234
  %v581 = vpop.f32.mrf.mxu0
  %v582 = vadd.f32 %v101, %v581
  %v583 = vpop.f32.mrf.mxu0
  %584 = vmatprep.mubr.f32.mxu0 0.0
  %585 = vmatmul.mubr.f32.gmra.mxu0 %v237
  %v586 = vpop.f32.mrf.mxu0
  %v587 = vadd.f32 %v101, %v586
  %v588 = vpop.f32.mrf.mxu0
  %589 = vmatprep.mubr.f32.mxu0 0.0
  %590 = vmatmul.mubr.f32.gmra.mxu0 %v240
  %v591 = vpop.f32.mrf.mxu0
  %v592 = vadd.f32 %v101, %v591
  %v593 = vpop.f32.mrf.mxu0
  %594 = vmatprep.mubr.f32.mxu0 0.0
  %595 = vmatmul.mubr.f32.gmra.mxu0 %v243
  %v596 = vpop.f32.mrf.mxu0
  %v597 = vadd.f32 %v101, %v596
  %v598 = vpop.f32.mrf.mxu0
  %599 = vmatprep.mubr.f32.mxu0 0.0
  %600 = vmatmul.mubr.f32.gmra.mxu0 %v246
  %v601 = vpop.f32.mrf.mxu0
  %v602 = vadd.f32 %v101, %v601
  %v603 = vpop.f32.mrf.mxu0
  %604 = vmatprep.mubr.f32.mxu0 0.0
  %605 = vmatmul.mubr.f32.gmra.mxu0 %v249
  %v606 = vpop.f32.mrf.mxu0
  %v607 = vadd.f32 %v101, %v606
  %v608 = vpop.f32.mrf.mxu0
  %609 = vmatprep.mubr.f32.mxu0 0.0
  %610 = vmatmul.mubr.f32.gmra.mxu0 %v252
  %v611 = vpop.f32.mrf.mxu0
  %v612 = vadd.f32 %v101, %v611
  %v613 = vpop.f32.mrf.mxu0
  %614 = vmatprep.mubr.f32.mxu0 0.0
  %615 = vmatmul.mubr.f32.gmra.mxu0 %v255
  %v616 = vpop.f32.mrf.mxu0
  %v617 = vadd.f32 %v101, %v616
  %v618 = vpop.f32.mrf.mxu0
  %619 = vmatprep.mubr.f32.mxu0 0.0
  %620 = vmatmul.mubr.f32.gmra.mxu0 %v258
  %v621 = vpop.f32.mrf.mxu0
  %v622 = vadd.f32 %v101, %v621
  %v623 = vpop.f32.mrf.mxu0
  %624 = vmatprep.mubr.f32.mxu0 0.0
  %625 = vmatmul.mubr.f32.gmra.mxu0 %v261
  %v626 = vpop.f32.mrf.mxu0
  %v627 = vadd.f32 %v101, %v626
  %v628 = vpop.f32.mrf.mxu0
  %629 = vmatprep.mubr.f32.mxu0 0.0
  %630 = vmatmul.mubr.f32.gmra.mxu0 %v264
  %v631 = vpop.f32.mrf.mxu0
  %v632 = vadd.f32 %v101, %v631
  %v633 = vpop.f32.mrf.mxu0
  %634 = vmatprep.mubr.f32.mxu0 0.0
  %635 = vmatmul.mubr.f32.gmra.mxu0 %v267
  %v636 = vpop.f32.mrf.mxu0
  %v637 = vadd.f32 %v101, %v636
  %v638 = vpop.f32.mrf.mxu0
  %639 = vmatprep.mubr.f32.mxu0 0.0
  %640 = vmatmul.mubr.f32.gmra.mxu0 %v270
  %v641 = vpop.f32.mrf.mxu0
  %v642 = vadd.f32 %v101, %v641
  %v643 = vpop.f32.mrf.mxu0
  %644 = vmatprep.mubr.f32.mxu0 0.0
  %645 = vmatmul.mubr.f32.gmra.mxu0 %v273
  %v646 = vpop.f32.mrf.mxu0
  %v647 = vadd.f32 %v101, %v646
  %v648 = vpop.f32.mrf.mxu0
  %649 = vmatprep.mubr.f32.mxu0 0.0
  %650 = vmatmul.mubr.f32.gmra.mxu0 %v276
  %v651 = vpop.f32.mrf.mxu0
  %v652 = vadd.f32 %v101, %v651
  %v653 = vpop.f32.mrf.mxu0
  %654 = vmatprep.mubr.f32.mxu0 0.0
  %655 = vmatmul.mubr.f32.gmra.mxu0 %v279
  %v656 = vpop.f32.mrf.mxu0
  %v657 = vadd.f32 %v101, %v656
  %v658 = vpop.f32.mrf.mxu0
  %659 = vmatprep.mubr.f32.mxu0 0.0
  %660 = vmatmul.mubr.f32.gmra.mxu0 %v282
  %v661 = vpop.f32.mrf.mxu0
  %v662 = vadd.f32 %v101, %v661
  %v663 = vpop.f32.mrf.mxu0
  %664 = vmatprep.mubr.f32.mxu0 0.0
  %665 = vmatmul.mubr.f32.gmra.mxu0 %v285
  %v666 = vpop.f32.mrf.mxu0
  %v667 = vadd.f32 %v101, %v666
  %v668 = vpop.f32.mrf.mxu0
  %669 = vmatprep.mubr.f32.mxu0 0.0
  %670 = vmatmul.mubr.f32.gmra.mxu0 %v288
  %v671 = vpop.f32.mrf.mxu0
  %v672 = vadd.f32 %v101, %v671
  %v673 = vpop.f32.mrf.mxu0
  %674 = vmatprep.mubr.f32.mxu0 0.0
  %675 = vmatmul.mubr.f32.gmra.mxu0 %v291
  %v676 = vpop.f32.mrf.mxu0
  %v677 = vadd.f32 %v101, %v676
  %v678 = vpop.f32.mrf.mxu0
  %679 = vmatprep.mubr.f32.mxu0 0.0
  %680 = vmatmul.mubr.f32.gmra.mxu0 %v294
  %v681 = vpop.f32.mrf.mxu0
  %v682 = vadd.f32 %v101, %v681
  %v683 = vpop.f32.mrf.mxu0
  %684 = vdwg.mxu0
  %v685 = vpack.c.bf16 %v372, %v367
  %v686 = vpack.c.bf16 %v382, %v377
  %v687 = vpack.c.bf16 %v392, %v387
  %v688 = vpack.c.bf16 %v402, %v397
  %v689 = vpack.c.bf16 %v412, %v407
  %v690 = vpack.c.bf16 %v422, %v417
  %v691 = vpack.c.bf16 %v432, %v427
  %v692 = vpack.c.bf16 %v442, %v437
  %v693 = vpack.c.bf16 %v452, %v447
  %v694 = vpack.c.bf16 %v462, %v457
  %v695 = vpack.c.bf16 %v472, %v467
  %v696 = vpack.c.bf16 %v482, %v477
  %v697 = vpack.c.bf16 %v492, %v487
  %v698 = vpack.c.bf16 %v502, %v497
  %v699 = vpack.c.bf16 %v512, %v507
  %v700 = vpack.c.bf16 %v522, %v517
  %v701 = vpack.c.bf16 %v532, %v527
  %v702 = vpack.c.bf16 %v542, %v537
  %v703 = vpack.c.bf16 %v552, %v547
  %v704 = vpack.c.bf16 %v562, %v557
  %v705 = vpack.c.bf16 %v572, %v567
  %v706 = vpack.c.bf16 %v582, %v577
  %v707 = vpack.c.bf16 %v592, %v587
  %v708 = vpack.c.bf16 %v602, %v597
  %v709 = vpack.c.bf16 %v612, %v607
  %v710 = vpack.c.bf16 %v622, %v617
  %v711 = vpack.c.bf16 %v632, %v627
  %v712 = vpack.c.bf16 %v642, %v637
  %v713 = vpack.c.bf16 %v652, %v647
  %v714 = vpack.c.bf16 %v662, %v657
  %v715 = vpack.c.bf16 %v672, %v667
  %v716 = vpack.c.bf16 %v682, %v677
  %v717 = vmax.bf16 %v685, 0
  %v718 = vmax.bf16 %v686, 0
  %v719 = vmax.bf16 %v687, 0
  %v720 = vmax.bf16 %v688, 0
  %v721 = vmax.bf16 %v689, 0
  %v722 = vmax.bf16 %v690, 0
  %v723 = vmax.bf16 %v691, 0
  %v724 = vmax.bf16 %v692, 0
  %v725 = vmax.bf16 %v693, 0
  %v726 = vmax.bf16 %v694, 0
  %v727 = vmax.bf16 %v695, 0
  %v728 = vmax.bf16 %v696, 0
  %v729 = vmax.bf16 %v697, 0
  %v730 = vmax.bf16 %v698, 0
  %v731 = vmax.bf16 %v699, 0
  %v732 = vmax.bf16 %v700, 0
  %v733 = vmax.bf16 %v701, 0
  %v734 = vmax.bf16 %v702, 0
  %v735 = vmax.bf16 %v703, 0
  %v736 = vmax.bf16 %v704, 0
  %v737 = vmax.bf16 %v705, 0
  %v738 = vmax.bf16 %v706, 0
  %v739 = vmax.bf16 %v707, 0
  %v740 = vmax.bf16 %v708, 0
  %v741 = vmax.bf16 %v709, 0
  %v742 = vmax.bf16 %v710, 0
  %v743 = vmax.bf16 %v711, 0
  %v744 = vmax.bf16 %v712, 0
  %v745 = vmax.bf16 %v713, 0
  %v746 = vmax.bf16 %v714, 0
  %v747 = vmax.bf16 %v715, 0
  %v748 = vmax.bf16 %v716, 0
  %v749 = vld [vmem:[%s3] sm:$0xf]
  %v750 = vld [vmem:[%s3 + $0x4] sm:$0xf]
  %v751 = vld [vmem:[%s3 + $0x8] sm:$0xf]
  %v752 = vld [vmem:[%s3 + $0xc] sm:$0xf]
  %v753 = vld [vmem:[%s3 + $0x10] sm:$0xf]
  %v754 = vld [vmem:[%s3 + $0x14] sm:$0xf]
  %v755 = vld [vmem:[%s3 + $0x18] sm:$0xf]
  %v756 = vld [vmem:[%s3 + $0x1c] sm:$0xf]
  %v757 = vld [vmem:[%s4] sm:$0x1]
  %v759 = vlaneseq
  %v760 = vshrl.u32 %v759, 7
  %v761 = vsub.s32 0, %v760
  %v762 = vrot.slane %v757, %v761
  %v772 = vunpack.c.l.b16 %v749
  %v773 = vunpack.c.l.b16 %v750
  %v774 = vunpack.c.l.b16 %v751
  %v775 = vunpack.c.l.b16 %v752
  %v776 = vunpack.c.l.b16 %v753
  %v777 = vunpack.c.l.b16 %v754
  %v778 = vunpack.c.l.b16 %v755
  %v779 = vunpack.c.l.b16 %v756
  %v780 = vpack.c.b16 %v773, %v772
  %v781 = vpack.c.b16 %v775, %v774
  %v782 = vpack.c.b16 %v777, %v776
  %v783 = vpack.c.b16 %v779, %v778
  %vm788 = vcmask 523264
  %v790 = vsel %vm788, %v717, 0
  %v793 = vsel %vm788, %v718, 0
  %v796 = vsel %vm788, %v719, 0
  %v799 = vsel %vm788, %v720, 0
  %v802 = vsel %vm788, %v721, 0
  %v805 = vsel %vm788, %v722, 0
  %v808 = vsel %vm788, %v723, 0
  %v811 = vsel %vm788, %v724, 0
  %v814 = vsel %vm788, %v725, 0
  %v817 = vsel %vm788, %v726, 0
  %v820 = vsel %vm788, %v727, 0
  %v823 = vsel %vm788, %v728, 0
  %v826 = vsel %vm788, %v729, 0
  %v829 = vsel %vm788, %v730, 0
  %v832 = vsel %vm788, %v731, 0
  %v835 = vsel %vm788, %v732, 0
  %v838 = vsel %vm788, %v733, 0
  %v841 = vsel %vm788, %v734, 0
  %v844 = vsel %vm788, %v735, 0
  %v847 = vsel %vm788, %v736, 0
  %v850 = vsel %vm788, %v737, 0
  %v853 = vsel %vm788, %v738, 0
  %v856 = vsel %vm788, %v739, 0
  %v859 = vsel %vm788, %v740, 0
  %v862 = vsel %vm788, %v741, 0
  %v865 = vsel %vm788, %v742, 0
  %v868 = vsel %vm788, %v743, 0
  %v871 = vsel %vm788, %v744, 0
  %v874 = vsel %vm788, %v745, 0
  %v877 = vsel %vm788, %v746, 0
  %v880 = vsel %vm788, %v747, 0
  %v883 = vsel %vm788, %v748, 0
  %885 = vmatprep.subr.bf16.mxu0 0
  %886 = vmatpush1.bf16.msra.mxu0 0
  %887 = vmatprep.subr.bf16.mxu0 0
  %888 = vmatpush1.bf16.msra.mxu0 0
  %889 = vmatprep.subr.bf16.mxu0 0
  %890 = vmatpush1.bf16.msra.mxu0 0
  %891 = vmatprep.subr.bf16.mxu0 0
  %892 = vmatpush1.bf16.msra.mxu0 0
  %893 = vmatprep.subr.bf16.mxu0 0
  %894 = vmatpush1.bf16.msra.mxu0 %v783
  %895 = vmatprep.subr.bf16.mxu0 0
  %896 = vmatpush1.bf16.msra.mxu0 %v782
  %897 = vmatprep.subr.bf16.mxu0 0
  %898 = vmatpush1.bf16.msra.mxu0 %v781
  %899 = vmatprep.subr.bf16.mxu0 0
  %900 = vmatpush1.bf16.msra.mxu0 %v780
  %901 = vmatprep.subr.bf16.mxu0 0
  %902 = vmatpush2.bf16.msra.mxu0 0
  %903 = vmatprep.subr.bf16.mxu0 0
  %904 = vmatpush2.bf16.msra.mxu0 0
  %905 = vmatprep.subr.bf16.mxu0 0
  %906 = vmatpush2.bf16.msra.mxu0 0
  %907 = vmatprep.subr.bf16.mxu0 0
  %908 = vmatpush2.bf16.msra.mxu0 0
  %909 = vmatprep.subr.bf16.mxu0 0
  %910 = vmatpush2.bf16.msra.mxu0 0
  %911 = vmatprep.subr.bf16.mxu0 0
  %912 = vmatpush2.bf16.msra.mxu0 0
  %913 = vmatprep.subr.bf16.mxu0 0
  %914 = vmatpush2.bf16.msra.mxu0 0
  %915 = vmatprep.subr.bf16.mxu0 0
  %916 = vmatpush2.bf16.msra.mxu0 0
  %917 = vmatprep.mubr.bf16.mxu0 0
  %918 = vmatmul.mubr.bf16.gmra.mxu0 %v790
  %v919 = vpop.f32.mrf.mxu0
  %v920 = vadd.f32 %v762, %v919
  %v921 = vpop.f32.mrf.mxu0
  %v922 = vpop.f32.mrf.mxu0
  %v923 = vadd.f32 %v762, %v922
  %v924 = vpop.f32.mrf.mxu0
  %925 = vmatprep.mubr.bf16.mxu0 0
  %926 = vmatmul.mubr.bf16.gmra.mxu0 %v793
  %v927 = vpop.f32.mrf.mxu0
  %v928 = vadd.f32 %v762, %v927
  %v929 = vpop.f32.mrf.mxu0
  %v930 = vpop.f32.mrf.mxu0
  %v931 = vadd.f32 %v762, %v930
  %v932 = vpop.f32.mrf.mxu0
  %933 = vmatprep.mubr.bf16.mxu0 0
  %934 = vmatmul.mubr.bf16.gmra.mxu0 %v796
  %v935 = vpop.f32.mrf.mxu0
  %v936 = vadd.f32 %v762, %v935
  %v937 = vpop.f32.mrf.mxu0
  %v938 = vpop.f32.mrf.mxu0
  %v939 = vadd.f32 %v762, %v938
  %v940 = vpop.f32.mrf.mxu0
  %941 = vmatprep.mubr.bf16.mxu0 0
  %942 = vmatmul.mubr.bf16.gmra.mxu0 %v799
  %v943 = vpop.f32.mrf.mxu0
  %v944 = vadd.f32 %v762, %v943
  %v945 = vpop.f32.mrf.mxu0
  %v946 = vpop.f32.mrf.mxu0
  %v947 = vadd.f32 %v762, %v946
  %v948 = vpop.f32.mrf.mxu0
  %949 = vmatprep.mubr.bf16.mxu0 0
  %950 = vmatmul.mubr.bf16.gmra.mxu0 %v802
  %v951 = vpop.f32.mrf.mxu0
  %v952 = vadd.f32 %v762, %v951
  %v953 = vpop.f32.mrf.mxu0
  %v954 = vpop.f32.mrf.mxu0
  %v955 = vadd.f32 %v762, %v954
  %v956 = vpop.f32.mrf.mxu0
  %957 = vmatprep.mubr.bf16.mxu0 0
  %958 = vmatmul.mubr.bf16.gmra.mxu0 %v805
  %v959 = vpop.f32.mrf.mxu0
  %v960 = vadd.f32 %v762, %v959
  %v961 = vpop.f32.mrf.mxu0
  %v962 = vpop.f32.mrf.mxu0
  %v963 = vadd.f32 %v762, %v962
  %v964 = vpop.f32.mrf.mxu0
  %965 = vmatprep.mubr.bf16.mxu0 0
  %966 = vmatmul.mubr.bf16.gmra.mxu0 %v808
  %v967 = vpop.f32.mrf.mxu0
  %v968 = vadd.f32 %v762, %v967
  %v969 = vpop.f32.mrf.mxu0
  %v970 = vpop.f32.mrf.mxu0
  %v971 = vadd.f32 %v762, %v970
  %v972 = vpop.f32.mrf.mxu0
  %973 = vmatprep.mubr.bf16.mxu0 0
  %974 = vmatmul.mubr.bf16.gmra.mxu0 %v811
  %v975 = vpop.f32.mrf.mxu0
  %v976 = vadd.f32 %v762, %v975
  %v977 = vpop.f32.mrf.mxu0
  %v978 = vpop.f32.mrf.mxu0
  %v979 = vadd.f32 %v762, %v978
  %v980 = vpop.f32.mrf.mxu0
  %981 = vmatprep.mubr.bf16.mxu0 0
  %982 = vmatmul.mubr.bf16.gmra.mxu0 %v814
  %v983 = vpop.f32.mrf.mxu0
  %v984 = vadd.f32 %v762, %v983
  %v985 = vpop.f32.mrf.mxu0
  %v986 = vpop.f32.mrf.mxu0
  %v987 = vadd.f32 %v762, %v986
  %v988 = vpop.f32.mrf.mxu0
  %989 = vmatprep.mubr.bf16.mxu0 0
  %990 = vmatmul.mubr.bf16.gmra.mxu0 %v817
  %v991 = vpop.f32.mrf.mxu0
  %v992 = vadd.f32 %v762, %v991
  %v993 = vpop.f32.mrf.mxu0
  %v994 = vpop.f32.mrf.mxu0
  %v995 = vadd.f32 %v762, %v994
  %v996 = vpop.f32.mrf.mxu0
  %997 = vmatprep.mubr.bf16.mxu0 0
  %998 = vmatmul.mubr.bf16.gmra.mxu0 %v820
  %v999 = vpop.f32.mrf.mxu0
  %v1000 = vadd.f32 %v762, %v999
  %v1001 = vpop.f32.mrf.mxu0
  %v1002 = vpop.f32.mrf.mxu0
  %v1003 = vadd.f32 %v762, %v1002
  %v1004 = vpop.f32.mrf.mxu0
  %1005 = vmatprep.mubr.bf16.mxu0 0
  %1006 = vmatmul.mubr.bf16.gmra.mxu0 %v823
  %v1007 = vpop.f32.mrf.mxu0
  %v1008 = vadd.f32 %v762, %v1007
  %v1009 = vpop.f32.mrf.mxu0
  %v1010 = vpop.f32.mrf.mxu0
  %v1011 = vadd.f32 %v762, %v1010
  %v1012 = vpop.f32.mrf.mxu0
  %1013 = vmatprep.mubr.bf16.mxu0 0
  %1014 = vmatmul.mubr.bf16.gmra.mxu0 %v826
  %v1015 = vpop.f32.mrf.mxu0
  %v1016 = vadd.f32 %v762, %v1015
  %v1017 = vpop.f32.mrf.mxu0
  %v1018 = vpop.f32.mrf.mxu0
  %v1019 = vadd.f32 %v762, %v1018
  %v1020 = vpop.f32.mrf.mxu0
  %1021 = vmatprep.mubr.bf16.mxu0 0
  %1022 = vmatmul.mubr.bf16.gmra.mxu0 %v829
  %v1023 = vpop.f32.mrf.mxu0
  %v1024 = vadd.f32 %v762, %v1023
  %v1025 = vpop.f32.mrf.mxu0
  %v1026 = vpop.f32.mrf.mxu0
  %v1027 = vadd.f32 %v762, %v1026
  %v1028 = vpop.f32.mrf.mxu0
  %1029 = vmatprep.mubr.bf16.mxu0 0
  %1030 = vmatmul.mubr.bf16.gmra.mxu0 %v832
  %v1031 = vpop.f32.mrf.mxu0
  %v1032 = vadd.f32 %v762, %v1031
  %v1033 = vpop.f32.mrf.mxu0
  %v1034 = vpop.f32.mrf.mxu0
  %v1035 = vadd.f32 %v762, %v1034
  %v1036 = vpop.f32.mrf.mxu0
  %1037 = vmatprep.mubr.bf16.mxu0 0
  %1038 = vmatmul.mubr.bf16.gmra.mxu0 %v835
  %v1039 = vpop.f32.mrf.mxu0
  %v1040 = vadd.f32 %v762, %v1039
  %v1041 = vpop.f32.mrf.mxu0
  %v1042 = vpop.f32.mrf.mxu0
  %v1043 = vadd.f32 %v762, %v1042
  %v1044 = vpop.f32.mrf.mxu0
  %1045 = vmatprep.mubr.bf16.mxu0 0
  %1046 = vmatmul.mubr.bf16.gmra.mxu0 %v838
  %v1047 = vpop.f32.mrf.mxu0
  %v1048 = vadd.f32 %v762, %v1047
  %v1049 = vpop.f32.mrf.mxu0
  %v1050 = vpop.f32.mrf.mxu0
  %v1051 = vadd.f32 %v762, %v1050
  %v1052 = vpop.f32.mrf.mxu0
  %1053 = vmatprep.mubr.bf16.mxu0 0
  %1054 = vmatmul.mubr.bf16.gmra.mxu0 %v841
  %v1055 = vpop.f32.mrf.mxu0
  %v1056 = vadd.f32 %v762, %v1055
  %v1057 = vpop.f32.mrf.mxu0
  %v1058 = vpop.f32.mrf.mxu0
  %v1059 = vadd.f32 %v762, %v1058
  %v1060 = vpop.f32.mrf.mxu0
  %1061 = vmatprep.mubr.bf16.mxu0 0
  %1062 = vmatmul.mubr.bf16.gmra.mxu0 %v844
  %v1063 = vpop.f32.mrf.mxu0
  %v1064 = vadd.f32 %v762, %v1063
  %v1065 = vpop.f32.mrf.mxu0
  %v1066 = vpop.f32.mrf.mxu0
  %v1067 = vadd.f32 %v762, %v1066
  %v1068 = vpop.f32.mrf.mxu0
  %1069 = vmatprep.mubr.bf16.mxu0 0
  %1070 = vmatmul.mubr.bf16.gmra.mxu0 %v847
  %v1071 = vpop.f32.mrf.mxu0
  %v1072 = vadd.f32 %v762, %v1071
  %v1073 = vpop.f32.mrf.mxu0
  %v1074 = vpop.f32.mrf.mxu0
  %v1075 = vadd.f32 %v762, %v1074
  %v1076 = vpop.f32.mrf.mxu0
  %1077 = vmatprep.mubr.bf16.mxu0 0
  %1078 = vmatmul.mubr.bf16.gmra.mxu0 %v850
  %v1079 = vpop.f32.mrf.mxu0
  %v1080 = vadd.f32 %v762, %v1079
  %v1081 = vpop.f32.mrf.mxu0
  %v1082 = vpop.f32.mrf.mxu0
  %v1083 = vadd.f32 %v762, %v1082
  %v1084 = vpop.f32.mrf.mxu0
  %1085 = vmatprep.mubr.bf16.mxu0 0
  %1086 = vmatmul.mubr.bf16.gmra.mxu0 %v853
  %v1087 = vpop.f32.mrf.mxu0
  %v1088 = vadd.f32 %v762, %v1087
  %v1089 = vpop.f32.mrf.mxu0
  %v1090 = vpop.f32.mrf.mxu0
  %v1091 = vadd.f32 %v762, %v1090
  %v1092 = vpop.f32.mrf.mxu0
  %1093 = vmatprep.mubr.bf16.mxu0 0
  %1094 = vmatmul.mubr.bf16.gmra.mxu0 %v856
  %v1095 = vpop.f32.mrf.mxu0
  %v1096 = vadd.f32 %v762, %v1095
  %v1097 = vpop.f32.mrf.mxu0
  %v1098 = vpop.f32.mrf.mxu0
  %v1099 = vadd.f32 %v762, %v1098
  %v1100 = vpop.f32.mrf.mxu0
  %1101 = vmatprep.mubr.bf16.mxu0 0
  %1102 = vmatmul.mubr.bf16.gmra.mxu0 %v859
  %v1103 = vpop.f32.mrf.mxu0
  %v1104 = vadd.f32 %v762, %v1103
  %v1105 = vpop.f32.mrf.mxu0
  %v1106 = vpop.f32.mrf.mxu0
  %v1107 = vadd.f32 %v762, %v1106
  %v1108 = vpop.f32.mrf.mxu0
  %1109 = vmatprep.mubr.bf16.mxu0 0
  %1110 = vmatmul.mubr.bf16.gmra.mxu0 %v862
  %v1111 = vpop.f32.mrf.mxu0
  %v1112 = vadd.f32 %v762, %v1111
  %v1113 = vpop.f32.mrf.mxu0
  %v1114 = vpop.f32.mrf.mxu0
  %v1115 = vadd.f32 %v762, %v1114
  %v1116 = vpop.f32.mrf.mxu0
  %1117 = vmatprep.mubr.bf16.mxu0 0
  %1118 = vmatmul.mubr.bf16.gmra.mxu0 %v865
  %v1119 = vpop.f32.mrf.mxu0
  %v1120 = vadd.f32 %v762, %v1119
  %v1121 = vpop.f32.mrf.mxu0
  %v1122 = vpop.f32.mrf.mxu0
  %v1123 = vadd.f32 %v762, %v1122
  %v1124 = vpop.f32.mrf.mxu0
  %1125 = vmatprep.mubr.bf16.mxu0 0
  %1126 = vmatmul.mubr.bf16.gmra.mxu0 %v868
  %v1127 = vpop.f32.mrf.mxu0
  %v1128 = vadd.f32 %v762, %v1127
  %v1129 = vpop.f32.mrf.mxu0
  %v1130 = vpop.f32.mrf.mxu0
  %v1131 = vadd.f32 %v762, %v1130
  %v1132 = vpop.f32.mrf.mxu0
  %1133 = vmatprep.mubr.bf16.mxu0 0
  %1134 = vmatmul.mubr.bf16.gmra.mxu0 %v871
  %v1135 = vpop.f32.mrf.mxu0
  %v1136 = vadd.f32 %v762, %v1135
  %v1137 = vpop.f32.mrf.mxu0
  %v1138 = vpop.f32.mrf.mxu0
  %v1139 = vadd.f32 %v762, %v1138
  %v1140 = vpop.f32.mrf.mxu0
  %1141 = vmatprep.mubr.bf16.mxu0 0
  %1142 = vmatmul.mubr.bf16.gmra.mxu0 %v874
  %v1143 = vpop.f32.mrf.mxu0
  %v1144 = vadd.f32 %v762, %v1143
  %v1145 = vpop.f32.mrf.mxu0
  %v1146 = vpop.f32.mrf.mxu0
  %v1147 = vadd.f32 %v762, %v1146
  %v1148 = vpop.f32.mrf.mxu0
  %1149 = vmatprep.mubr.bf16.mxu0 0
  %1150 = vmatmul.mubr.bf16.gmra.mxu0 %v877
  %v1151 = vpop.f32.mrf.mxu0
  %v1152 = vadd.f32 %v762, %v1151
  %v1153 = vpop.f32.mrf.mxu0
  %v1154 = vpop.f32.mrf.mxu0
  %v1155 = vadd.f32 %v762, %v1154
  %v1156 = vpop.f32.mrf.mxu0
  %1157 = vmatprep.mubr.bf16.mxu0 0
  %1158 = vmatmul.mubr.bf16.gmra.mxu0 %v880
  %v1159 = vpop.f32.mrf.mxu0
  %v1160 = vadd.f32 %v762, %v1159
  %v1161 = vpop.f32.mrf.mxu0
  %v1162 = vpop.f32.mrf.mxu0
  %v1163 = vadd.f32 %v762, %v1162
  %v1164 = vpop.f32.mrf.mxu0
  %1165 = vmatprep.mubr.bf16.mxu0 0
  %1166 = vmatmul.mubr.bf16.gmra.mxu0 %v883
  %v1167 = vpop.f32.mrf.mxu0
  %v1168 = vadd.f32 %v762, %v1167
  %v1169 = vpop.f32.mrf.mxu0
  %v1170 = vpop.f32.mrf.mxu0
  %v1171 = vadd.f32 %v762, %v1170
  %v1172 = vpop.f32.mrf.mxu0
  %1173 = vdwg.mxu0
  %v1174 = vpack.c.bf16 %v923, %v920
  %v1175 = vpack.c.bf16 %v931, %v928
  %v1176 = vpack.c.bf16 %v939, %v936
  %v1177 = vpack.c.bf16 %v947, %v944
  %v1178 = vpack.c.bf16 %v955, %v952
  %v1179 = vpack.c.bf16 %v963, %v960
  %v1180 = vpack.c.bf16 %v971, %v968
  %v1181 = vpack.c.bf16 %v979, %v976
  %v1182 = vpack.c.bf16 %v987, %v984
  %v1183 = vpack.c.bf16 %v995, %v992
  %v1184 = vpack.c.bf16 %v1003, %v1000
  %v1185 = vpack.c.bf16 %v1011, %v1008
  %v1186 = vpack.c.bf16 %v1019, %v1016
  %v1187 = vpack.c.bf16 %v1027, %v1024
  %v1188 = vpack.c.bf16 %v1035, %v1032
  %v1189 = vpack.c.bf16 %v1043, %v1040
  %v1190 = vpack.c.bf16 %v1051, %v1048
  %v1191 = vpack.c.bf16 %v1059, %v1056
  %v1192 = vpack.c.bf16 %v1067, %v1064
  %v1193 = vpack.c.bf16 %v1075, %v1072
  %v1194 = vpack.c.bf16 %v1083, %v1080
  %v1195 = vpack.c.bf16 %v1091, %v1088
  %v1196 = vpack.c.bf16 %v1099, %v1096
  %v1197 = vpack.c.bf16 %v1107, %v1104
  %v1198 = vpack.c.bf16 %v1115, %v1112
  %v1199 = vpack.c.bf16 %v1123, %v1120
  %v1200 = vpack.c.bf16 %v1131, %v1128
  %v1201 = vpack.c.bf16 %v1139, %v1136
  %v1202 = vpack.c.bf16 %v1147, %v1144
  %v1203 = vpack.c.bf16 %v1155, %v1152
  %v1204 = vpack.c.bf16 %v1163, %v1160
  %v1205 = vpack.c.bf16 %v1171, %v1168
  %v1206 = vmax.bf16 %v1174, 0
  %v1207 = vmax.bf16 %v1175, 0
  %v1208 = vmax.bf16 %v1176, 0
  %v1209 = vmax.bf16 %v1177, 0
  %v1210 = vmax.bf16 %v1178, 0
  %v1211 = vmax.bf16 %v1179, 0
  %v1212 = vmax.bf16 %v1180, 0
  %v1213 = vmax.bf16 %v1181, 0
  %v1214 = vmax.bf16 %v1182, 0
  %v1215 = vmax.bf16 %v1183, 0
  %v1216 = vmax.bf16 %v1184, 0
  %v1217 = vmax.bf16 %v1185, 0
  %v1218 = vmax.bf16 %v1186, 0
  %v1219 = vmax.bf16 %v1187, 0
  %v1220 = vmax.bf16 %v1188, 0
  %v1221 = vmax.bf16 %v1189, 0
  %v1222 = vmax.bf16 %v1190, 0
  %v1223 = vmax.bf16 %v1191, 0
  %v1224 = vmax.bf16 %v1192, 0
  %v1225 = vmax.bf16 %v1193, 0
  %v1226 = vmax.bf16 %v1194, 0
  %v1227 = vmax.bf16 %v1195, 0
  %v1228 = vmax.bf16 %v1196, 0
  %v1229 = vmax.bf16 %v1197, 0
  %v1230 = vmax.bf16 %v1198, 0
  %v1231 = vmax.bf16 %v1199, 0
  %v1232 = vmax.bf16 %v1200, 0
  %v1233 = vmax.bf16 %v1201, 0
  %v1234 = vmax.bf16 %v1202, 0
  %v1235 = vmax.bf16 %v1203, 0
  %v1236 = vmax.bf16 %v1204, 0
  %v1237 = vmax.bf16 %v1205, 0
  %v1238 = vld [vmem:[%s5] sm:$0xf]
  %v1239 = vld [vmem:[%s5 + $0x4] sm:$0xf]
  %v1240 = vld [vmem:[%s5 + $0x8] sm:$0xf]
  %v1241 = vld [vmem:[%s5 + $0xc] sm:$0xf]
  %v1242 = vld [vmem:[%s5 + $0x10] sm:$0xf]
  %v1243 = vld [vmem:[%s5 + $0x14] sm:$0xf]
  %v1244 = vld [vmem:[%s5 + $0x18] sm:$0xf]
  %v1245 = vld [vmem:[%s5 + $0x1c] sm:$0xf]
  %v1246 = vld [vmem:[%s6] sm:$0x1]
  %v1248 = vlaneseq
  %v1249 = vshrl.u32 %v1248, 7
  %v1250 = vsub.s32 0, %v1249
  %v1251 = vrot.slane %v1246, %v1250
  %v1261 = vunpack.c.l.b16 %v1238
  %v1262 = vunpack.c.l.b16 %v1239
  %v1263 = vunpack.c.l.b16 %v1240
  %v1264 = vunpack.c.l.b16 %v1241
  %v1265 = vunpack.c.l.b16 %v1242
  %v1266 = vunpack.c.l.b16 %v1243
  %v1267 = vunpack.c.l.b16 %v1244
  %v1268 = vunpack.c.l.b16 %v1245
  %v1269 = vpack.c.b16 %v1262, %v1261
  %v1270 = vpack.c.b16 %v1264, %v1263
  %v1271 = vpack.c.b16 %v1266, %v1265
  %v1272 = vpack.c.b16 %v1268, %v1267
  %v1278 = vsel %vm788, %v1206, 0
  %v1281 = vsel %vm788, %v1207, 0
  %v1284 = vsel %vm788, %v1208, 0
  %v1287 = vsel %vm788, %v1209, 0
  %v1290 = vsel %vm788, %v1210, 0
  %v1293 = vsel %vm788, %v1211, 0
  %v1296 = vsel %vm788, %v1212, 0
  %v1299 = vsel %vm788, %v1213, 0
  %v1302 = vsel %vm788, %v1214, 0
  %v1305 = vsel %vm788, %v1215, 0
  %v1308 = vsel %vm788, %v1216, 0
  %v1311 = vsel %vm788, %v1217, 0
  %v1314 = vsel %vm788, %v1218, 0
  %v1317 = vsel %vm788, %v1219, 0
  %v1320 = vsel %vm788, %v1220, 0
  %v1323 = vsel %vm788, %v1221, 0
  %v1326 = vsel %vm788, %v1222, 0
  %v1329 = vsel %vm788, %v1223, 0
  %v1332 = vsel %vm788, %v1224, 0
  %v1335 = vsel %vm788, %v1225, 0
  %v1338 = vsel %vm788, %v1226, 0
  %v1341 = vsel %vm788, %v1227, 0
  %v1344 = vsel %vm788, %v1228, 0
  %v1347 = vsel %vm788, %v1229, 0
  %v1350 = vsel %vm788, %v1230, 0
  %v1353 = vsel %vm788, %v1231, 0
  %v1356 = vsel %vm788, %v1232, 0
  %v1359 = vsel %vm788, %v1233, 0
  %v1362 = vsel %vm788, %v1234, 0
  %v1365 = vsel %vm788, %v1235, 0
  %v1368 = vsel %vm788, %v1236, 0
  %v1371 = vsel %vm788, %v1237, 0
  %1373 = vmatprep.subr.bf16.mxu0 0
  %1374 = vmatpush1.bf16.msra.mxu0 0
  %1375 = vmatprep.subr.bf16.mxu0 0
  %1376 = vmatpush1.bf16.msra.mxu0 0
  %1377 = vmatprep.subr.bf16.mxu0 0
  %1378 = vmatpush1.bf16.msra.mxu0 0
  %1379 = vmatprep.subr.bf16.mxu0 0
  %1380 = vmatpush1.bf16.msra.mxu0 0
  %1381 = vmatprep.subr.bf16.mxu0 0
  %1382 = vmatpush1.bf16.msra.mxu0 %v1272
  %1383 = vmatprep.subr.bf16.mxu0 0
  %1384 = vmatpush1.bf16.msra.mxu0 %v1271
  %1385 = vmatprep.subr.bf16.mxu0 0
  %1386 = vmatpush1.bf16.msra.mxu0 %v1270
  %1387 = vmatprep.subr.bf16.mxu0 0
  %1388 = vmatpush1.bf16.msra.mxu0 %v1269
  %1389 = vmatprep.subr.bf16.mxu0 0
  %1390 = vmatpush2.bf16.msra.mxu0 0
  %1391 = vmatprep.subr.bf16.mxu0 0
  %1392 = vmatpush2.bf16.msra.mxu0 0
  %1393 = vmatprep.subr.bf16.mxu0 0
  %1394 = vmatpush2.bf16.msra.mxu0 0
  %1395 = vmatprep.subr.bf16.mxu0 0
  %1396 = vmatpush2.bf16.msra.mxu0 0
  %1397 = vmatprep.subr.bf16.mxu0 0
  %1398 = vmatpush2.bf16.msra.mxu0 0
  %1399 = vmatprep.subr.bf16.mxu0 0
  %1400 = vmatpush2.bf16.msra.mxu0 0
  %1401 = vmatprep.subr.bf16.mxu0 0
  %1402 = vmatpush2.bf16.msra.mxu0 0
  %1403 = vmatprep.subr.bf16.mxu0 0
  %1404 = vmatpush2.bf16.msra.mxu0 0
  %1405 = vmatprep.mubr.bf16.mxu0 0
  %1406 = vmatmul.mubr.bf16.gmra.mxu0 %v1278
  %v1407 = vpop.f32.mrf.mxu0
  %v1408 = vadd.f32 %v1251, %v1407
  %v1409 = vpop.f32.mrf.mxu0
  %v1410 = vpop.f32.mrf.mxu0
  %v1411 = vadd.f32 %v1251, %v1410
  %v1412 = vpop.f32.mrf.mxu0
  %1413 = vmatprep.mubr.bf16.mxu0 0
  %1414 = vmatmul.mubr.bf16.gmra.mxu0 %v1281
  %v1415 = vpop.f32.mrf.mxu0
  %v1416 = vadd.f32 %v1251, %v1415
  %v1417 = vpop.f32.mrf.mxu0
  %v1418 = vpop.f32.mrf.mxu0
  %v1419 = vadd.f32 %v1251, %v1418
  %v1420 = vpop.f32.mrf.mxu0
  %1421 = vmatprep.mubr.bf16.mxu0 0
  %1422 = vmatmul.mubr.bf16.gmra.mxu0 %v1284
  %v1423 = vpop.f32.mrf.mxu0
  %v1424 = vadd.f32 %v1251, %v1423
  %v1425 = vpop.f32.mrf.mxu0
  %v1426 = vpop.f32.mrf.mxu0
  %v1427 = vadd.f32 %v1251, %v1426
  %v1428 = vpop.f32.mrf.mxu0
  %1429 = vmatprep.mubr.bf16.mxu0 0
  %1430 = vmatmul.mubr.bf16.gmra.mxu0 %v1287
  %v1431 = vpop.f32.mrf.mxu0
  %v1432 = vadd.f32 %v1251, %v1431
  %v1433 = vpop.f32.mrf.mxu0
  %v1434 = vpop.f32.mrf.mxu0
  %v1435 = vadd.f32 %v1251, %v1434
  %v1436 = vpop.f32.mrf.mxu0
  %1437 = vmatprep.mubr.bf16.mxu0 0
  %1438 = vmatmul.mubr.bf16.gmra.mxu0 %v1290
  %v1439 = vpop.f32.mrf.mxu0
  %v1440 = vadd.f32 %v1251, %v1439
  %v1441 = vpop.f32.mrf.mxu0
  %v1442 = vpop.f32.mrf.mxu0
  %v1443 = vadd.f32 %v1251, %v1442
  %v1444 = vpop.f32.mrf.mxu0
  %1445 = vmatprep.mubr.bf16.mxu0 0
  %1446 = vmatmul.mubr.bf16.gmra.mxu0 %v1293
  %v1447 = vpop.f32.mrf.mxu0
  %v1448 = vadd.f32 %v1251, %v1447
  %v1449 = vpop.f32.mrf.mxu0
  %v1450 = vpop.f32.mrf.mxu0
  %v1451 = vadd.f32 %v1251, %v1450
  %v1452 = vpop.f32.mrf.mxu0
  %1453 = vmatprep.mubr.bf16.mxu0 0
  %1454 = vmatmul.mubr.bf16.gmra.mxu0 %v1296
  %v1455 = vpop.f32.mrf.mxu0
  %v1456 = vadd.f32 %v1251, %v1455
  %v1457 = vpop.f32.mrf.mxu0
  %v1458 = vpop.f32.mrf.mxu0
  %v1459 = vadd.f32 %v1251, %v1458
  %v1460 = vpop.f32.mrf.mxu0
  %1461 = vmatprep.mubr.bf16.mxu0 0
  %1462 = vmatmul.mubr.bf16.gmra.mxu0 %v1299
  %v1463 = vpop.f32.mrf.mxu0
  %v1464 = vadd.f32 %v1251, %v1463
  %v1465 = vpop.f32.mrf.mxu0
  %v1466 = vpop.f32.mrf.mxu0
  %v1467 = vadd.f32 %v1251, %v1466
  %v1468 = vpop.f32.mrf.mxu0
  %1469 = vmatprep.mubr.bf16.mxu0 0
  %1470 = vmatmul.mubr.bf16.gmra.mxu0 %v1302
  %v1471 = vpop.f32.mrf.mxu0
  %v1472 = vadd.f32 %v1251, %v1471
  %v1473 = vpop.f32.mrf.mxu0
  %v1474 = vpop.f32.mrf.mxu0
  %v1475 = vadd.f32 %v1251, %v1474
  %v1476 = vpop.f32.mrf.mxu0
  %1477 = vmatprep.mubr.bf16.mxu0 0
  %1478 = vmatmul.mubr.bf16.gmra.mxu0 %v1305
  %v1479 = vpop.f32.mrf.mxu0
  %v1480 = vadd.f32 %v1251, %v1479
  %v1481 = vpop.f32.mrf.mxu0
  %v1482 = vpop.f32.mrf.mxu0
  %v1483 = vadd.f32 %v1251, %v1482
  %v1484 = vpop.f32.mrf.mxu0
  %1485 = vmatprep.mubr.bf16.mxu0 0
  %1486 = vmatmul.mubr.bf16.gmra.mxu0 %v1308
  %v1487 = vpop.f32.mrf.mxu0
  %v1488 = vadd.f32 %v1251, %v1487
  %v1489 = vpop.f32.mrf.mxu0
  %v1490 = vpop.f32.mrf.mxu0
  %v1491 = vadd.f32 %v1251, %v1490
  %v1492 = vpop.f32.mrf.mxu0
  %1493 = vmatprep.mubr.bf16.mxu0 0
  %1494 = vmatmul.mubr.bf16.gmra.mxu0 %v1311
  %v1495 = vpop.f32.mrf.mxu0
  %v1496 = vadd.f32 %v1251, %v1495
  %v1497 = vpop.f32.mrf.mxu0
  %v1498 = vpop.f32.mrf.mxu0
  %v1499 = vadd.f32 %v1251, %v1498
  %v1500 = vpop.f32.mrf.mxu0
  %1501 = vmatprep.mubr.bf16.mxu0 0
  %1502 = vmatmul.mubr.bf16.gmra.mxu0 %v1314
  %v1503 = vpop.f32.mrf.mxu0
  %v1504 = vadd.f32 %v1251, %v1503
  %v1505 = vpop.f32.mrf.mxu0
  %v1506 = vpop.f32.mrf.mxu0
  %v1507 = vadd.f32 %v1251, %v1506
  %v1508 = vpop.f32.mrf.mxu0
  %1509 = vmatprep.mubr.bf16.mxu0 0
  %1510 = vmatmul.mubr.bf16.gmra.mxu0 %v1317
  %v1511 = vpop.f32.mrf.mxu0
  %v1512 = vadd.f32 %v1251, %v1511
  %v1513 = vpop.f32.mrf.mxu0
  %v1514 = vpop.f32.mrf.mxu0
  %v1515 = vadd.f32 %v1251, %v1514
  %v1516 = vpop.f32.mrf.mxu0
  %1517 = vmatprep.mubr.bf16.mxu0 0
  %1518 = vmatmul.mubr.bf16.gmra.mxu0 %v1320
  %v1519 = vpop.f32.mrf.mxu0
  %v1520 = vadd.f32 %v1251, %v1519
  %v1521 = vpop.f32.mrf.mxu0
  %v1522 = vpop.f32.mrf.mxu0
  %v1523 = vadd.f32 %v1251, %v1522
  %v1524 = vpop.f32.mrf.mxu0
  %1525 = vmatprep.mubr.bf16.mxu0 0
  %1526 = vmatmul.mubr.bf16.gmra.mxu0 %v1323
  %v1527 = vpop.f32.mrf.mxu0
  %v1528 = vadd.f32 %v1251, %v1527
  %v1529 = vpop.f32.mrf.mxu0
  %v1530 = vpop.f32.mrf.mxu0
  %v1531 = vadd.f32 %v1251, %v1530
  %v1532 = vpop.f32.mrf.mxu0
  %1533 = vmatprep.mubr.bf16.mxu0 0
  %1534 = vmatmul.mubr.bf16.gmra.mxu0 %v1326
  %v1535 = vpop.f32.mrf.mxu0
  %v1536 = vadd.f32 %v1251, %v1535
  %v1537 = vpop.f32.mrf.mxu0
  %v1538 = vpop.f32.mrf.mxu0
  %v1539 = vadd.f32 %v1251, %v1538
  %v1540 = vpop.f32.mrf.mxu0
  %1541 = vmatprep.mubr.bf16.mxu0 0
  %1542 = vmatmul.mubr.bf16.gmra.mxu0 %v1329
  %v1543 = vpop.f32.mrf.mxu0
  %v1544 = vadd.f32 %v1251, %v1543
  %v1545 = vpop.f32.mrf.mxu0
  %v1546 = vpop.f32.mrf.mxu0
  %v1547 = vadd.f32 %v1251, %v1546
  %v1548 = vpop.f32.mrf.mxu0
  %1549 = vmatprep.mubr.bf16.mxu0 0
  %1550 = vmatmul.mubr.bf16.gmra.mxu0 %v1332
  %v1551 = vpop.f32.mrf.mxu0
  %v1552 = vadd.f32 %v1251, %v1551
  %v1553 = vpop.f32.mrf.mxu0
  %v1554 = vpop.f32.mrf.mxu0
  %v1555 = vadd.f32 %v1251, %v1554
  %v1556 = vpop.f32.mrf.mxu0
  %1557 = vmatprep.mubr.bf16.mxu0 0
  %1558 = vmatmul.mubr.bf16.gmra.mxu0 %v1335
  %v1559 = vpop.f32.mrf.mxu0
  %v1560 = vadd.f32 %v1251, %v1559
  %v1561 = vpop.f32.mrf.mxu0
  %v1562 = vpop.f32.mrf.mxu0
  %v1563 = vadd.f32 %v1251, %v1562
  %v1564 = vpop.f32.mrf.mxu0
  %1565 = vmatprep.mubr.bf16.mxu0 0
  %1566 = vmatmul.mubr.bf16.gmra.mxu0 %v1338
  %v1567 = vpop.f32.mrf.mxu0
  %v1568 = vadd.f32 %v1251, %v1567
  %v1569 = vpop.f32.mrf.mxu0
  %v1570 = vpop.f32.mrf.mxu0
  %v1571 = vadd.f32 %v1251, %v1570
  %v1572 = vpop.f32.mrf.mxu0
  %1573 = vmatprep.mubr.bf16.mxu0 0
  %1574 = vmatmul.mubr.bf16.gmra.mxu0 %v1341
  %v1575 = vpop.f32.mrf.mxu0
  %v1576 = vadd.f32 %v1251, %v1575
  %v1577 = vpop.f32.mrf.mxu0
  %v1578 = vpop.f32.mrf.mxu0
  %v1579 = vadd.f32 %v1251, %v1578
  %v1580 = vpop.f32.mrf.mxu0
  %1581 = vmatprep.mubr.bf16.mxu0 0
  %1582 = vmatmul.mubr.bf16.gmra.mxu0 %v1344
  %v1583 = vpop.f32.mrf.mxu0
  %v1584 = vadd.f32 %v1251, %v1583
  %v1585 = vpop.f32.mrf.mxu0
  %v1586 = vpop.f32.mrf.mxu0
  %v1587 = vadd.f32 %v1251, %v1586
  %v1588 = vpop.f32.mrf.mxu0
  %1589 = vmatprep.mubr.bf16.mxu0 0
  %1590 = vmatmul.mubr.bf16.gmra.mxu0 %v1347
  %v1591 = vpop.f32.mrf.mxu0
  %v1592 = vadd.f32 %v1251, %v1591
  %v1593 = vpop.f32.mrf.mxu0
  %v1594 = vpop.f32.mrf.mxu0
  %v1595 = vadd.f32 %v1251, %v1594
  %v1596 = vpop.f32.mrf.mxu0
  %1597 = vmatprep.mubr.bf16.mxu0 0
  %1598 = vmatmul.mubr.bf16.gmra.mxu0 %v1350
  %v1599 = vpop.f32.mrf.mxu0
  %v1600 = vadd.f32 %v1251, %v1599
  %v1601 = vpop.f32.mrf.mxu0
  %v1602 = vpop.f32.mrf.mxu0
  %v1603 = vadd.f32 %v1251, %v1602
  %v1604 = vpop.f32.mrf.mxu0
  %1605 = vmatprep.mubr.bf16.mxu0 0
  %1606 = vmatmul.mubr.bf16.gmra.mxu0 %v1353
  %v1607 = vpop.f32.mrf.mxu0
  %v1608 = vadd.f32 %v1251, %v1607
  %v1609 = vpop.f32.mrf.mxu0
  %v1610 = vpop.f32.mrf.mxu0
  %v1611 = vadd.f32 %v1251, %v1610
  %v1612 = vpop.f32.mrf.mxu0
  %1613 = vmatprep.mubr.bf16.mxu0 0
  %1614 = vmatmul.mubr.bf16.gmra.mxu0 %v1356
  %v1615 = vpop.f32.mrf.mxu0
  %v1616 = vadd.f32 %v1251, %v1615
  %v1617 = vpop.f32.mrf.mxu0
  %v1618 = vpop.f32.mrf.mxu0
  %v1619 = vadd.f32 %v1251, %v1618
  %v1620 = vpop.f32.mrf.mxu0
  %1621 = vmatprep.mubr.bf16.mxu0 0
  %1622 = vmatmul.mubr.bf16.gmra.mxu0 %v1359
  %v1623 = vpop.f32.mrf.mxu0
  %v1624 = vadd.f32 %v1251, %v1623
  %v1625 = vpop.f32.mrf.mxu0
  %v1626 = vpop.f32.mrf.mxu0
  %v1627 = vadd.f32 %v1251, %v1626
  %v1628 = vpop.f32.mrf.mxu0
  %1629 = vmatprep.mubr.bf16.mxu0 0
  %1630 = vmatmul.mubr.bf16.gmra.mxu0 %v1362
  %v1631 = vpop.f32.mrf.mxu0
  %v1632 = vadd.f32 %v1251, %v1631
  %v1633 = vpop.f32.mrf.mxu0
  %v1634 = vpop.f32.mrf.mxu0
  %v1635 = vadd.f32 %v1251, %v1634
  %v1636 = vpop.f32.mrf.mxu0
  %1637 = vmatprep.mubr.bf16.mxu0 0
  %1638 = vmatmul.mubr.bf16.gmra.mxu0 %v1365
  %v1639 = vpop.f32.mrf.mxu0
  %v1640 = vadd.f32 %v1251, %v1639
  %v1641 = vpop.f32.mrf.mxu0
  %v1642 = vpop.f32.mrf.mxu0
  %v1643 = vadd.f32 %v1251, %v1642
  %v1644 = vpop.f32.mrf.mxu0
  %1645 = vmatprep.mubr.bf16.mxu0 0
  %1646 = vmatmul.mubr.bf16.gmra.mxu0 %v1368
  %v1647 = vpop.f32.mrf.mxu0
  %v1648 = vadd.f32 %v1251, %v1647
  %v1649 = vpop.f32.mrf.mxu0
  %v1650 = vpop.f32.mrf.mxu0
  %v1651 = vadd.f32 %v1251, %v1650
  %v1652 = vpop.f32.mrf.mxu0
  %1653 = vmatprep.mubr.bf16.mxu0 0
  %1654 = vmatmul.mubr.bf16.gmra.mxu0 %v1371
  %v1655 = vpop.f32.mrf.mxu0
  %v1656 = vadd.f32 %v1251, %v1655
  %v1657 = vpop.f32.mrf.mxu0
  %v1658 = vpop.f32.mrf.mxu0
  %v1659 = vadd.f32 %v1251, %v1658
  %v1660 = vpop.f32.mrf.mxu0
  %1661 = vdwg.mxu0
  %vm1662 = vcmask 31744
  %1663 = vst.msk [vmem:[%s7] sm:$0xff] %vm1662, %v1408
  %1664 = vst.msk [vmem:[%s7 + $0x8] sm:$0xff] %vm1662, %v1411
  %1665 = vst.msk [vmem:[%s7 + $0x10] sm:$0xff] %vm1662, %v1416
  %1666 = vst.msk [vmem:[%s7 + $0x18] sm:$0xff] %vm1662, %v1419
  %1667 = vst.msk [vmem:[%s7 + $0x20] sm:$0xff] %vm1662, %v1424
  %1668 = vst.msk [vmem:[%s7 + $0x28] sm:$0xff] %vm1662, %v1427
  %1669 = vst.msk [vmem:[%s7 + $0x30] sm:$0xff] %vm1662, %v1432
  %1670 = vst.msk [vmem:[%s7 + $0x38] sm:$0xff] %vm1662, %v1435
  %1671 = vst.msk [vmem:[%s7 + $0x40] sm:$0xff] %vm1662, %v1440
  %1672 = vst.msk [vmem:[%s7 + $0x48] sm:$0xff] %vm1662, %v1443
  %1673 = vst.msk [vmem:[%s7 + $0x50] sm:$0xff] %vm1662, %v1448
  %1674 = vst.msk [vmem:[%s7 + $0x58] sm:$0xff] %vm1662, %v1451
  %1675 = vst.msk [vmem:[%s7 + $0x60] sm:$0xff] %vm1662, %v1456
  %1676 = vst.msk [vmem:[%s7 + $0x68] sm:$0xff] %vm1662, %v1459
  %1677 = vst.msk [vmem:[%s7 + $0x70] sm:$0xff] %vm1662, %v1464
  %1678 = vst.msk [vmem:[%s7 + $0x78] sm:$0xff] %vm1662, %v1467
  %1679 = vst.msk [vmem:[%s7 + $0x80] sm:$0xff] %vm1662, %v1472
  %1680 = vst.msk [vmem:[%s7 + $0x88] sm:$0xff] %vm1662, %v1475
  %1681 = vst.msk [vmem:[%s7 + $0x90] sm:$0xff] %vm1662, %v1480
  %1682 = vst.msk [vmem:[%s7 + $0x98] sm:$0xff] %vm1662, %v1483
  %1683 = vst.msk [vmem:[%s7 + $0xa0] sm:$0xff] %vm1662, %v1488
  %1684 = vst.msk [vmem:[%s7 + $0xa8] sm:$0xff] %vm1662, %v1491
  %1685 = vst.msk [vmem:[%s7 + $0xb0] sm:$0xff] %vm1662, %v1496
  %1686 = vst.msk [vmem:[%s7 + $0xb8] sm:$0xff] %vm1662, %v1499
  %1687 = vst.msk [vmem:[%s7 + $0xc0] sm:$0xff] %vm1662, %v1504
  %1688 = vst.msk [vmem:[%s7 + $0xc8] sm:$0xff] %vm1662, %v1507
  %1689 = vst.msk [vmem:[%s7 + $0xd0] sm:$0xff] %vm1662, %v1512
  %1690 = vst.msk [vmem:[%s7 + $0xd8] sm:$0xff] %vm1662, %v1515
  %1691 = vst.msk [vmem:[%s7 + $0xe0] sm:$0xff] %vm1662, %v1520
  %1692 = vst.msk [vmem:[%s7 + $0xe8] sm:$0xff] %vm1662, %v1523
  %1693 = vst.msk [vmem:[%s7 + $0xf0] sm:$0xff] %vm1662, %v1528
  %1694 = vst.msk [vmem:[%s7 + $0xf8] sm:$0xff] %vm1662, %v1531
  %1695 = vst.msk [vmem:[%s7 + $0x100] sm:$0xff] %vm1662, %v1536
  %1696 = vst.msk [vmem:[%s7 + $0x108] sm:$0xff] %vm1662, %v1539
  %1697 = vst.msk [vmem:[%s7 + $0x110] sm:$0xff] %vm1662, %v1544
  %1698 = vst.msk [vmem:[%s7 + $0x118] sm:$0xff] %vm1662, %v1547
  %1699 = vst.msk [vmem:[%s7 + $0x120] sm:$0xff] %vm1662, %v1552
  %1700 = vst.msk [vmem:[%s7 + $0x128] sm:$0xff] %vm1662, %v1555
  %1701 = vst.msk [vmem:[%s7 + $0x130] sm:$0xff] %vm1662, %v1560
  %1702 = vst.msk [vmem:[%s7 + $0x138] sm:$0xff] %vm1662, %v1563
  %1703 = vst.msk [vmem:[%s7 + $0x140] sm:$0xff] %vm1662, %v1568
  %1704 = vst.msk [vmem:[%s7 + $0x148] sm:$0xff] %vm1662, %v1571
  %1705 = vst.msk [vmem:[%s7 + $0x150] sm:$0xff] %vm1662, %v1576
  %1706 = vst.msk [vmem:[%s7 + $0x158] sm:$0xff] %vm1662, %v1579
  %1707 = vst.msk [vmem:[%s7 + $0x160] sm:$0xff] %vm1662, %v1584
  %1708 = vst.msk [vmem:[%s7 + $0x168] sm:$0xff] %vm1662, %v1587
  %1709 = vst.msk [vmem:[%s7 + $0x170] sm:$0xff] %vm1662, %v1592
  %1710 = vst.msk [vmem:[%s7 + $0x178] sm:$0xff] %vm1662, %v1595
  %1711 = vst.msk [vmem:[%s7 + $0x180] sm:$0xff] %vm1662, %v1600
  %1712 = vst.msk [vmem:[%s7 + $0x188] sm:$0xff] %vm1662, %v1603
  %1713 = vst.msk [vmem:[%s7 + $0x190] sm:$0xff] %vm1662, %v1608
  %1714 = vst.msk [vmem:[%s7 + $0x198] sm:$0xff] %vm1662, %v1611
  %1715 = vst.msk [vmem:[%s7 + $0x1a0] sm:$0xff] %vm1662, %v1616
  %1716 = vst.msk [vmem:[%s7 + $0x1a8] sm:$0xff] %vm1662, %v1619
  %1717 = vst.msk [vmem:[%s7 + $0x1b0] sm:$0xff] %vm1662, %v1624
  %1718 = vst.msk [vmem:[%s7 + $0x1b8] sm:$0xff] %vm1662, %v1627
  %1719 = vst.msk [vmem:[%s7 + $0x1c0] sm:$0xff] %vm1662, %v1632
  %1720 = vst.msk [vmem:[%s7 + $0x1c8] sm:$0xff] %vm1662, %v1635
  %1721 = vst.msk [vmem:[%s7 + $0x1d0] sm:$0xff] %vm1662, %v1640
  %1722 = vst.msk [vmem:[%s7 + $0x1d8] sm:$0xff] %vm1662, %v1643
  %1723 = vst.msk [vmem:[%s7 + $0x1e0] sm:$0xff] %vm1662, %v1648
  %1724 = vst.msk [vmem:[%s7 + $0x1e8] sm:$0xff] %vm1662, %v1651
  %1725 = vst.msk [vmem:[%s7 + $0x1f0] sm:$0xff] %vm1662, %v1656
  %1726 = vst.msk [vmem:[%s7 + $0x1f8] sm:$0xff] %vm1662, %v1659
  // Predicated region
  $region30: #{tpu_custom_call.1} parent=0 // pred_check
    _
  $region31: #{tpu_custom_call.1} parent=0 // pred_check_branch
    %1728 = sbr.rel (0) target = $region33
  $region32: #{tpu_custom_call.1} parent=0 // pred_region
    _
  $region33: #{tpu_custom_call.1} parent=0 // pred_fallthru
    _
  // Predicated region
  $region34: #{tpu_custom_call.1} parent=0 // pred_check
    _
  $region35: #{tpu_custom_call.1} parent=0 // pred_check_branch
    %1730 = sbr.rel (0) target = $region37
  $region36: #{tpu_custom_call.1} parent=0 // pred_region
    _
  $region37: #{tpu_custom_call.1} parent=0 // pred_fallthru
    _

</llo_original>
